<compile_context>
chip_gen: v5e
topology: v5e:2x2
jax: 0.10.0
libtpu: 0.0.40
codegen_flags: <defaults>
</compile_context>

<pallas_src>
import functools

import jax
import jax.numpy as jnp
import numpy as np
from jax import lax
from jax.experimental import pallas as pl
from jax.experimental.pallas import tpu as pltpu

# ---- synthetic "opts" ----
NUM_FEATURES = 32          # opts.num_features
KERNEL_SIZE = 3            # opts.kernel_size
CONV_DEPTH = 4             # opts.conv_depth -> conv + 2*(conv+BN+ReLU) + conv
PE_RES = 6                 # opts.pe_res
POS_SIZE = PE_RES * 2 + 1  # 13
N_MID = CONV_DEPTH - 2
BN_EPS = 1e-5
LN2 = float(np.log(2.0))
HALF_PI = float(np.pi / 2.0)


def _conv3_rollmm(h, wm1_bf, wc_bf, wp1_bf, bias, mask_m1, mask_p1):
    """'same' zero-padded K=3 conv on a batch-folded (C, B*L) f32 slab.

    Roll-after-matmul form: three (F,F)@(F,BL) bf16 MXU matmuls, then the two
    side taps are lane-rolled and seam-masked.  No im2col scratch traffic."""
    BL = h.shape[1]
    h_bf = h.astype(jnp.bfloat16)
    yc = jnp.dot(wc_bf, h_bf, preferred_element_type=jnp.float32)
    ym1 = jnp.dot(wm1_bf, h_bf, preferred_element_type=jnp.float32)
    yp1 = jnp.dot(wp1_bf, h_bf, preferred_element_type=jnp.float32)
    return (yc
            + mask_m1 * pltpu.roll(ym1, shift=1, axis=1)        # tap l-1
            + mask_p1 * pltpu.roll(yp1, shift=BL - 1, axis=1)   # tap l+1
            + bias)


def pixelnerf_kernel(L, x_ref, prior_ref,
                     c0w_ref, c0b_ref,
                     mwm1_ref, mwc_ref, mwp1_ref, mb_ref, bng_ref, bnb_ref,
                     clwm1_ref, clwc_ref, clwp1_ref, clb_ref,
                     w1p_ref, w1xid_ref, w1sc_ref, b1_ref, w2t_ref, b2_ref,
                     out_ref):
    BL = x_ref.shape[1]
    inv_n = 1.0 / float(BL)

    # Conv boundary masks (zero-padding + batch-seam) from a lane iota; the
    # compare/select is free VPU filler, saves the (2, BL) HBM input.
    lane = lax.broadcasted_iota(jnp.int32, (1, BL), 1)
    pos = (lane & (L - 1)) if (L & (L - 1)) == 0 else lax.rem(lane, L)
    mask_m1 = jnp.where(pos >= 1, 1.0, 0.0)        # l-1 tap stays inside sample
    mask_p1 = jnp.where(pos <= L - 2, 1.0, 0.0)    # l+1 tap stays inside sample

    # ---- PriorCNN: first conv (Cin=1, no activation): broadcast FMAs ----
    prior0 = prior_ref[...]                                     # (1, BL)
    left = pltpu.roll(prior0, shift=1, axis=1) * mask_m1        # h[:, l-1]
    right = pltpu.roll(prior0, shift=BL - 1, axis=1) * mask_p1  # h[:, l+1]
    h = (c0w_ref[:, 0:1] * left + c0w_ref[:, 1:2] * prior0
         + c0w_ref[:, 2:3] * right + c0b_ref[...])              # (F, BL)

    # ---- mid layers: conv -> BatchNorm1d (batch stats) -> ReLU ----
    for m in range(N_MID):
        h = _conv3_rollmm(h, mwm1_ref[m], mwc_ref[m], mwp1_ref[m], mb_ref[m],
                          mask_m1, mask_p1)
        # One-pass biased batch statistics over all B*L lanes, folded into a
        # single FMA + ReLU pass.
        s = jnp.sum(h, axis=1, keepdims=True)                   # (F, 1)
        s2 = jnp.sum(h * h, axis=1, keepdims=True)              # (F, 1)
        mean = s * inv_n
        var = s2 * inv_n - mean * mean
        scale = lax.rsqrt(var + BN_EPS) * bng_ref[m]
        shift = bnb_ref[m] - mean * scale
        h = jnp.maximum(h * scale + shift, 0.0)

    # ---- last conv ----
    prior = _conv3_rollmm(h, clwm1_ref[...], clwc_ref[...], clwp1_ref[...],
                          clb_ref[...], mask_m1, mask_p1)       # (F, BL)

    # ---- PE (merged sin/cos slab) + MLP head ----
    x = x_ref[...]                                              # (1, BL)
    r = lax.broadcasted_iota(jnp.int32, (2 * PE_RES, 1), 0).astype(jnp.float32)
    is_cos = jnp.where(r >= PE_RES, 1.0, 0.0)
    freq = jnp.exp((r - is_cos * PE_RES) * LN2)                 # 2^(r mod PE_RES)
    phase = is_cos * HALF_PI                                    # cos(t)=sin(t+pi/2)
    pe = jnp.sin(freq * x + phase)                              # (2*PE_RES, BL), one EUP pass

    hidden = (jnp.dot(w1p_ref[...], prior.astype(jnp.bfloat16),
                      preferred_element_type=jnp.float32)
              + jnp.dot(w1sc_ref[...], pe.astype(jnp.bfloat16),
                        preferred_element_type=jnp.float32)
              + w1xid_ref[...] * x
              + b1_ref[...])
    hidden = jnp.maximum(hidden, 0.0)                           # (32, BL)

    # Final 32->1 projection: VPU multiply + sublane reduce (no 1-row MXU op).
    out_ref[...] = jnp.sum(w2t_ref[...] * hidden, axis=0, keepdims=True) + b2_ref[...]


def _vmem_budget_bytes():
    """Per-generation VMEM cap: ~75% of physical (≈96 MiB v5e/v6e, ≈48 MiB v7x)."""
    try:
        info = pltpu.get_tpu_info()
        cap = int(getattr(info, "vmem_capacity_bytes", 0) or 0)
        if cap > 0:
            return min(int(0.75 * cap), 96 << 20)
    except Exception:
        pass
    return 48 << 20   # safe on every generation (v7x has 64 MiB physical)


def pixelnerf_forward(x, prior_in, p):
    B, _, L = x.shape
    BL = B * L
    F = NUM_FEATURES

    # Fold batch into the lane axis: (B, 1, L) -> (1, B*L); lane index = b*L + l.
    x_f = x.reshape(1, BL)
    prior_f = prior_in.reshape(1, BL)

    # Split flattened conv weights [l-1 | l | l+1] into per-tap (F, F) blocks
    # and cast matmul operands to bf16 (f32 accumulation in-kernel).
    bf = jnp.bfloat16
    mwm1 = p['mw'][:, :, 0:F].astype(bf)
    mwc = p['mw'][:, :, F:2 * F].astype(bf)
    mwp1 = p['mw'][:, :, 2 * F:3 * F].astype(bf)
    clwm1 = p['clw'][:, 0:F].astype(bf)
    clwc = p['clw'][:, F:2 * F].astype(bf)
    clwp1 = p['clw'][:, 2 * F:3 * F].astype(bf)

    # W1's PE columns (PyTorch order [x, sin r0, cos r0, sin r1, cos r1, ...])
    # regrouped into identity + [sin | cos] blocks for the merged-PE dot.
    w1x_id = p['w1x'][:, 0:1]                                            # (32, 1)
    w1sc = jnp.concatenate([p['w1x'][:, 1::2], p['w1x'][:, 2::2]], axis=1).astype(bf)
    w1p = p['w1p'].astype(bf)

    args = (x_f, prior_f,
            p['c0w'], p['c0b'],
            mwm1, mwc, mwp1, p['mb'], p['bng'], p['bnb'],
            clwm1, clwc, clwp1, p['clb'],
            w1p, w1x_id, w1sc, p['b1'], p['w2t'], p['b2'])

    param_bytes = sum(int(np.prod(a.shape)) * a.dtype.itemsize for a in args[2:])
    flops = BL * (2 * 3 * F                               # first conv FMAs
                  + (N_MID + 1) * 3 * 2 * F * F           # mid + last convs
                  + 2 * 32 * F + 2 * 32 * (2 * PE_RES)    # MLP head matmuls
                  + 2 * 32)                               # final reduce
    bytes_accessed = param_bytes + 4 * BL * 3
    vmem_est = 4 * BL * (8 * F + 4 * PE_RES + 8) + param_bytes + (4 << 20)
    vmem_limit = int(min(max(vmem_est, 16 << 20), _vmem_budget_bytes()))

    vmem_spec = pl.BlockSpec(memory_space=pltpu.MemorySpace.VMEM)
    out = pl.pallas_call(
        functools.partial(pixelnerf_kernel, L),
        out_shape=jax.ShapeDtypeStruct((1, BL), jnp.float32),
        in_specs=[vmem_spec] * len(args),
        out_specs=vmem_spec,
        compiler_params=pltpu.CompilerParams(vmem_limit_bytes=vmem_limit),
        cost_estimate=pl.CostEstimate(flops=int(flops),
                                      transcendentals=int(2 * PE_RES * BL),
                                      bytes_accessed=int(bytes_accessed)),
    )(*args)

    # (1, B*L) lane order b*L+l -> (B*L, 1): matches permute(0,2,1).reshape(B*L, C).
    return out.reshape(BL, 1)


def init_params(key):
    F, K = NUM_FEATURES, KERNEL_SIZE
    ks = jax.random.split(key, 13)

    def u(k, shape, fan_in):
        bound = 1.0 / np.sqrt(fan_in)
        return jax.random.uniform(k, shape, jnp.float32, -bound, bound)

    p = {}
    # Conv weights are stored pre-flattened:
    # w_flat[o, k*Cin + i] == torch_conv.weight[o, i, k]  (tap order l-1, l, l+1).
    p['c0w'] = u(ks[0], (F, K * 1), 1 * K)          # first conv (Cin=1)
    p['c0b'] = u(ks[1], (F, 1), 1 * K)
    p['mw'] = u(ks[2], (N_MID, F, K * F), F * K)    # mid convs
    p['mb'] = u(ks[3], (N_MID, F, 1), F * K)
    p['bng'] = 1.0 + 0.1 * jax.random.normal(ks[4], (N_MID, F, 1), jnp.float32)
    p['bnb'] = 0.1 * jax.random.normal(ks[5], (N_MID, F, 1), jnp.float32)
    p['clw'] = u(ks[6], (F, K * F), F * K)          # last conv
    p['clb'] = u(ks[7], (F, 1), F * K)
    p['w1p'] = u(ks[8], (32, F), F + POS_SIZE)      # Linear(F+POS, 32): prior columns
    p['w1x'] = u(ks[9], (32, POS_SIZE), F + POS_SIZE)  # PE columns (canonical order)
    p['b1'] = u(ks[10], (32, 1), F + POS_SIZE)
    p['w2t'] = u(ks[11], (32, 1), 32)               # Linear(32, 1) weight, transposed
    p['b2'] = u(ks[12], (1, 1), 32)
    return p


def reference_forward(x, prior_in, p):
    """Pure-JAX replica of the PyTorch forward (training-mode BatchNorm)."""
    B, _, L = x.shape
    pad = KERNEL_SIZE // 2

    def conv(h, w_flat, bias):
        Cout = w_flat.shape[0]
        Cin = w_flat.shape[1] // KERNEL_SIZE
        w = jnp.transpose(w_flat.reshape(Cout, KERNEL_SIZE, Cin), (0, 2, 1))  # (O, I, K)
        y = lax.conv_general_dilated(h, w, window_strides=(1,), padding=[(pad, pad)],
                                     dimension_numbers=('NCH', 'OIH', 'NCH'),
                                     precision=lax.Precision.HIGHEST)
        return y + bias[None]

    h = conv(prior_in, p['c0w'], p['c0b'])
    for m in range(N_MID):
        h = conv(h, p['mw'][m], p['mb'][m])
        mean = jnp.mean(h, axis=(0, 2), keepdims=True)
        var = jnp.mean((h - mean) ** 2, axis=(0, 2), keepdims=True)
        h = (h - mean) / jnp.sqrt(var + BN_EPS) * p['bng'][m][None] + p['bnb'][m][None]
        h = jnp.maximum(h, 0.0)
    prior = conv(h, p['clw'], p['clb'])

    outs = [x]
    for r in range(PE_RES):
        outs.append(jnp.sin(x * 2.0 ** r))
        outs.append(jnp.cos(x * 2.0 ** r))
    pe = jnp.concatenate(outs, axis=1)

    mlp_in = jnp.concatenate([prior, pe], axis=1)                  # (B, F+POS, L)
    mlp_in = jnp.transpose(mlp_in, (0, 2, 1)).reshape(B * L, -1)
    W1 = jnp.concatenate([p['w1p'], p['w1x']], axis=1)
    hid = jnp.maximum(mlp_in @ W1.T + p['b1'][:, 0], 0.0)
    return hid @ p['w2t'] + p['b2'][0]


if __name__ == "__main__":
    key = jax.random.PRNGKey(0)
    kx, kp, kw = jax.random.split(key, 3)
    B, L = 2, 128
    x = jax.random.normal(kx, (B, 1, L), jnp.float32)
    prior_in = jax.random.normal(kp, (B, 1, L), jnp.float32)
    params = init_params(kw)

    out = jax.block_until_ready(pixelnerf_forward(x, prior_in, params))

    ref = reference_forward(x, prior_in, params)
    np.testing.assert_allclose(np.asarray(out), np.asarray(ref), rtol=2e-2, atol=2e-2)
    assert out.shape == (B * L, 1)
    print("KERNEL_OK")
</pallas_src>

<mosaic_0001>
module attributes {stable_mosaic.version = 11 : i64} {
  func.func @pixelnerf_kernel(%arg0: memref<1x256xf32, #tpu.memory_space<vmem>>, %arg1: memref<1x256xf32, #tpu.memory_space<vmem>>, %arg2: memref<32x3xf32, #tpu.memory_space<vmem>>, %arg3: memref<32x1xf32, #tpu.memory_space<vmem>>, %arg4: memref<2x32x32xbf16, #tpu.memory_space<vmem>>, %arg5: memref<2x32x32xbf16, #tpu.memory_space<vmem>>, %arg6: memref<2x32x32xbf16, #tpu.memory_space<vmem>>, %arg7: memref<2x32x1xf32, #tpu.memory_space<vmem>>, %arg8: memref<2x32x1xf32, #tpu.memory_space<vmem>>, %arg9: memref<2x32x1xf32, #tpu.memory_space<vmem>>, %arg10: memref<32x32xbf16, #tpu.memory_space<vmem>>, %arg11: memref<32x32xbf16, #tpu.memory_space<vmem>>, %arg12: memref<32x32xbf16, #tpu.memory_space<vmem>>, %arg13: memref<32x1xf32, #tpu.memory_space<vmem>>, %arg14: memref<32x32xbf16, #tpu.memory_space<vmem>>, %arg15: memref<32x1xf32, #tpu.memory_space<vmem>>, %arg16: memref<32x12xbf16, #tpu.memory_space<vmem>>, %arg17: memref<32x1xf32, #tpu.memory_space<vmem>>, %arg18: memref<32x1xf32, #tpu.memory_space<vmem>>, %arg19: memref<1x1xf32, #tpu.memory_space<vmem>>, %arg20: memref<1x256xf32, #tpu.memory_space<vmem>>) attributes {dimension_semantics = [], scalar_prefetch = 0 : i64, scratch_operands = 0 : i64, tpu.core_type = #tpu.core_type<tc>} {
    %0 = tpu.iota {dimensions = array<i32: 1>} : vector<1x256xi32>
    %c127_i32 = arith.constant 127 : i32
    %1 = vector.broadcast %c127_i32 : i32 to vector<1x256xi32>
    %2 = arith.andi %0, %1 : vector<1x256xi32>
    %c1_i32 = arith.constant 1 : i32
    %3 = vector.broadcast %c1_i32 : i32 to vector<1x256xi32>
    %4 = arith.cmpi sge, %2, %3 : vector<1x256xi32>
    %cst = arith.constant 1.000000e+00 : f32
    %cst_0 = arith.constant 0.000000e+00 : f32
    %5 = vector.broadcast %cst : f32 to vector<1x256xf32>
    %6 = vector.broadcast %cst_0 : f32 to vector<1x256xf32>
    %7 = arith.select %4, %5, %6 : vector<1x256xi1>, vector<1x256xf32>
    %c126_i32 = arith.constant 126 : i32
    %8 = vector.broadcast %c126_i32 : i32 to vector<1x256xi32>
    %9 = arith.cmpi sle, %2, %8 : vector<1x256xi32>
    %cst_1 = arith.constant 1.000000e+00 : f32
    %cst_2 = arith.constant 0.000000e+00 : f32
    %10 = vector.broadcast %cst_1 : f32 to vector<1x256xf32>
    %11 = vector.broadcast %cst_2 : f32 to vector<1x256xf32>
    %12 = arith.select %9, %10, %11 : vector<1x256xi1>, vector<1x256xf32>
    %c0 = arith.constant 0 : index
    %c0_3 = arith.constant 0 : index
    %13 = vector.load %arg1[%c0, %c0_3] : memref<1x256xf32, #tpu.memory_space<vmem>>, vector<1x256xf32>
    %c1_i32_4 = arith.constant 1 : i32
    %14 = tpu.dynamic_rotate %13 by %c1_i32_4 dim 1 : vector<1x256xf32>, i32 -> vector<1x256xf32>
    %15 = arith.mulf %14, %7 : vector<1x256xf32>
    %c255_i32 = arith.constant 255 : i32
    %16 = tpu.dynamic_rotate %13 by %c255_i32 dim 1 : vector<1x256xf32>, i32 -> vector<1x256xf32>
    %17 = arith.mulf %16, %12 : vector<1x256xf32>
    %c0_5 = arith.constant 0 : index
    %c0_6 = arith.constant 0 : index
    %18 = vector.load %arg2[%c0_5, %c0_6] : memref<32x3xf32, #tpu.memory_space<vmem>>, vector<32x1xf32>
    %19 = vector.broadcast %18 : vector<32x1xf32> to vector<32x256xf32>
    %20 = vector.broadcast %15 : vector<1x256xf32> to vector<32x256xf32>
    %21 = arith.mulf %19, %20 : vector<32x256xf32>
    %c0_7 = arith.constant 0 : index
    %c1 = arith.constant 1 : index
    %22 = vector.load %arg2[%c0_7, %c1] : memref<32x3xf32, #tpu.memory_space<vmem>>, vector<32x1xf32>
    %23 = vector.broadcast %22 : vector<32x1xf32> to vector<32x256xf32>
    %24 = vector.broadcast %13 : vector<1x256xf32> to vector<32x256xf32>
    %25 = arith.mulf %23, %24 : vector<32x256xf32>
    %26 = arith.addf %21, %25 : vector<32x256xf32>
    %c0_8 = arith.constant 0 : index
    %c2 = arith.constant 2 : index
    %27 = vector.load %arg2[%c0_8, %c2] : memref<32x3xf32, #tpu.memory_space<vmem>>, vector<32x1xf32>
    %28 = vector.broadcast %27 : vector<32x1xf32> to vector<32x256xf32>
    %29 = vector.broadcast %17 : vector<1x256xf32> to vector<32x256xf32>
    %30 = arith.mulf %28, %29 : vector<32x256xf32>
    %31 = arith.addf %26, %30 : vector<32x256xf32>
    %c0_9 = arith.constant 0 : index
    %c0_10 = arith.constant 0 : index
    %32 = vector.load %arg3[%c0_9, %c0_10] : memref<32x1xf32, #tpu.memory_space<vmem>>, vector<32x1xf32>
    %33 = vector.broadcast %32 : vector<32x1xf32> to vector<32x256xf32>
    %34 = arith.addf %31, %33 : vector<32x256xf32>
    %c0_11 = arith.constant 0 : index
    %c0_12 = arith.constant 0 : index
    %c0_13 = arith.constant 0 : index
    %35 = vector.load %arg4[%c0_11, %c0_12, %c0_13] : memref<2x32x32xbf16, #tpu.memory_space<vmem>>, vector<1x32x32xbf16>
    %36 = vector.shape_cast %35 : vector<1x32x32xbf16> to vector<32x32xbf16>
    %c0_14 = arith.constant 0 : index
    %c0_15 = arith.constant 0 : index
    %c0_16 = arith.constant 0 : index
    %37 = vector.load %arg5[%c0_14, %c0_15, %c0_16] : memref<2x32x32xbf16, #tpu.memory_space<vmem>>, vector<1x32x32xbf16>
    %38 = vector.shape_cast %37 : vector<1x32x32xbf16> to vector<32x32xbf16>
    %c0_17 = arith.constant 0 : index
    %c0_18 = arith.constant 0 : index
    %c0_19 = arith.constant 0 : index
    %39 = vector.load %arg6[%c0_17, %c0_18, %c0_19] : memref<2x32x32xbf16, #tpu.memory_space<vmem>>, vector<1x32x32xbf16>
    %40 = vector.shape_cast %39 : vector<1x32x32xbf16> to vector<32x32xbf16>
    %c0_20 = arith.constant 0 : index
    %c0_21 = arith.constant 0 : index
    %c0_22 = arith.constant 0 : index
    %41 = vector.load %arg7[%c0_20, %c0_21, %c0_22] : memref<2x32x1xf32, #tpu.memory_space<vmem>>, vector<1x32x1xf32>
    %42 = vector.shape_cast %41 : vector<1x32x1xf32> to vector<32x1xf32>
    %43 = arith.truncf %34 : vector<32x256xf32> to vector<32x256xbf16>
    %cst_23 = arith.constant dense<0.000000e+00> : vector<32x256xf32>
    %44 = tpu.matmul %38, %43, %cst_23 {dimension_numbers = #tpu.dot_dimension_numbers<[1], [0], [0], [1], [0, 0, 1, 1], [], []>} : vector<32x32xbf16>, vector<32x256xbf16>, vector<32x256xf32> -> vector<32x256xf32>
    %cst_24 = arith.constant dense<0.000000e+00> : vector<32x256xf32>
    %45 = tpu.matmul %36, %43, %cst_24 {dimension_numbers = #tpu.dot_dimension_numbers<[1], [0], [0], [1], [0, 0, 1, 1], [], []>} : vector<32x32xbf16>, vector<32x256xbf16>, vector<32x256xf32> -> vector<32x256xf32>
    %cst_25 = arith.constant dense<0.000000e+00> : vector<32x256xf32>
    %46 = tpu.matmul %40, %43, %cst_25 {dimension_numbers = #tpu.dot_dimension_numbers<[1], [0], [0], [1], [0, 0, 1, 1], [], []>} : vector<32x32xbf16>, vector<32x256xbf16>, vector<32x256xf32> -> vector<32x256xf32>
    %c1_i32_26 = arith.constant 1 : i32
    %47 = tpu.dynamic_rotate %45 by %c1_i32_26 dim 1 : vector<32x256xf32>, i32 -> vector<32x256xf32>
    %48 = vector.broadcast %7 : vector<1x256xf32> to vector<32x256xf32>
    %49 = arith.mulf %48, %47 : vector<32x256xf32>
    %50 = arith.addf %44, %49 : vector<32x256xf32>
    %c255_i32_27 = arith.constant 255 : i32
    %51 = tpu.dynamic_rotate %46 by %c255_i32_27 dim 1 : vector<32x256xf32>, i32 -> vector<32x256xf32>
    %52 = vector.broadcast %12 : vector<1x256xf32> to vector<32x256xf32>
    %53 = arith.mulf %52, %51 : vector<32x256xf32>
    %54 = arith.addf %50, %53 : vector<32x256xf32>
    %55 = vector.broadcast %42 : vector<32x1xf32> to vector<32x256xf32>
    %56 = arith.addf %54, %55 : vector<32x256xf32>
    %cst_28 = arith.constant dense<0.000000e+00> : vector<32xf32>
    %57 = vector.multi_reduction <add>, %56, %cst_28 [1] : vector<32x256xf32> to vector<32xf32>
    %58 = vector.shape_cast %57 : vector<32xf32> to vector<32x1xf32>
    %59 = arith.mulf %56, %56 : vector<32x256xf32>
    %cst_29 = arith.constant dense<0.000000e+00> : vector<32xf32>
    %60 = vector.multi_reduction <add>, %59, %cst_29 [1] : vector<32x256xf32> to vector<32xf32>
    %61 = vector.shape_cast %60 : vector<32xf32> to vector<32x1xf32>
    %cst_30 = arith.constant 3.906250e-03 : f32
    %62 = vector.broadcast %cst_30 : f32 to vector<32x1xf32>
    %63 = arith.mulf %58, %62 : vector<32x1xf32>
    %cst_31 = arith.constant 3.906250e-03 : f32
    %64 = vector.broadcast %cst_31 : f32 to vector<32x1xf32>
    %65 = arith.mulf %61, %64 : vector<32x1xf32>
    %66 = arith.mulf %63, %63 : vector<32x1xf32>
    %67 = arith.subf %65, %66 : vector<32x1xf32>
    %cst_32 = arith.constant 9.99999974E-6 : f32
    %68 = vector.broadcast %cst_32 : f32 to vector<32x1xf32>
    %69 = arith.addf %67, %68 : vector<32x1xf32>
    %70 = math.rsqrt %69 : vector<32x1xf32>
    %c0_33 = arith.constant 0 : index
    %c0_34 = arith.constant 0 : index
    %c0_35 = arith.constant 0 : index
    %71 = vector.load %arg8[%c0_33, %c0_34, %c0_35] : memref<2x32x1xf32, #tpu.memory_space<vmem>>, vector<1x32x1xf32>
    %72 = vector.shape_cast %71 : vector<1x32x1xf32> to vector<32x1xf32>
    %73 = arith.mulf %70, %72 : vector<32x1xf32>
    %c0_36 = arith.constant 0 : index
    %c0_37 = arith.constant 0 : index
    %c0_38 = arith.constant 0 : index
    %74 = vector.load %arg9[%c0_36, %c0_37, %c0_38] : memref<2x32x1xf32, #tpu.memory_space<vmem>>, vector<1x32x1xf32>
    %75 = vector.shape_cast %74 : vector<1x32x1xf32> to vector<32x1xf32>
    %76 = arith.mulf %63, %73 : vector<32x1xf32>
    %77 = arith.subf %75, %76 : vector<32x1xf32>
    %78 = vector.broadcast %73 : vector<32x1xf32> to vector<32x256xf32>
    %79 = arith.mulf %56, %78 : vector<32x256xf32>
    %80 = vector.broadcast %77 : vector<32x1xf32> to vector<32x256xf32>
    %81 = arith.addf %79, %80 : vector<32x256xf32>
    %cst_39 = arith.constant 0.000000e+00 : f32
    %82 = vector.broadcast %cst_39 : f32 to vector<32x256xf32>
    %83 = arith.maximumf %81, %82 : vector<32x256xf32>
    %c1_40 = arith.constant 1 : index
    %c0_41 = arith.constant 0 : index
    %c0_42 = arith.constant 0 : index
    %84 = vector.load %arg4[%c1_40, %c0_41, %c0_42] : memref<2x32x32xbf16, #tpu.memory_space<vmem>>, vector<1x32x32xbf16>
    %85 = vector.shape_cast %84 : vector<1x32x32xbf16> to vector<32x32xbf16>
    %c1_43 = arith.constant 1 : index
    %c0_44 = arith.constant 0 : index
    %c0_45 = arith.constant 0 : index
    %86 = vector.load %arg5[%c1_43, %c0_44, %c0_45] : memref<2x32x32xbf16, #tpu.memory_space<vmem>>, vector<1x32x32xbf16>
    %87 = vector.shape_cast %86 : vector<1x32x32xbf16> to vector<32x32xbf16>
    %c1_46 = arith.constant 1 : index
    %c0_47 = arith.constant 0 : index
    %c0_48 = arith.constant 0 : index
    %88 = vector.load %arg6[%c1_46, %c0_47, %c0_48] : memref<2x32x32xbf16, #tpu.memory_space<vmem>>, vector<1x32x32xbf16>
    %89 = vector.shape_cast %88 : vector<1x32x32xbf16> to vector<32x32xbf16>
    %c1_49 = arith.constant 1 : index
    %c0_50 = arith.constant 0 : index
    %c0_51 = arith.constant 0 : index
    %90 = vector.load %arg7[%c1_49, %c0_50, %c0_51] : memref<2x32x1xf32, #tpu.memory_space<vmem>>, vector<1x32x1xf32>
    %91 = vector.shape_cast %90 : vector<1x32x1xf32> to vector<32x1xf32>
    %92 = arith.truncf %83 : vector<32x256xf32> to vector<32x256xbf16>
    %cst_52 = arith.constant dense<0.000000e+00> : vector<32x256xf32>
    %93 = tpu.matmul %87, %92, %cst_52 {dimension_numbers = #tpu.dot_dimension_numbers<[1], [0], [0], [1], [0, 0, 1, 1], [], []>} : vector<32x32xbf16>, vector<32x256xbf16>, vector<32x256xf32> -> vector<32x256xf32>
    %cst_53 = arith.constant dense<0.000000e+00> : vector<32x256xf32>
    %94 = tpu.matmul %85, %92, %cst_53 {dimension_numbers = #tpu.dot_dimension_numbers<[1], [0], [0], [1], [0, 0, 1, 1], [], []>} : vector<32x32xbf16>, vector<32x256xbf16>, vector<32x256xf32> -> vector<32x256xf32>
    %cst_54 = arith.constant dense<0.000000e+00> : vector<32x256xf32>
    %95 = tpu.matmul %89, %92, %cst_54 {dimension_numbers = #tpu.dot_dimension_numbers<[1], [0], [0], [1], [0, 0, 1, 1], [], []>} : vector<32x32xbf16>, vector<32x256xbf16>, vector<32x256xf32> -> vector<32x256xf32>
    %c1_i32_55 = arith.constant 1 : i32
    %96 = tpu.dynamic_rotate %94 by %c1_i32_55 dim 1 : vector<32x256xf32>, i32 -> vector<32x256xf32>
    %97 = vector.broadcast %7 : vector<1x256xf32> to vector<32x256xf32>
    %98 = arith.mulf %97, %96 : vector<32x256xf32>
    %99 = arith.addf %93, %98 : vector<32x256xf32>
    %c255_i32_56 = arith.constant 255 : i32
    %100 = tpu.dynamic_rotate %95 by %c255_i32_56 dim 1 : vector<32x256xf32>, i32 -> vector<32x256xf32>
    %101 = vector.broadcast %12 : vector<1x256xf32> to vector<32x256xf32>
    %102 = arith.mulf %101, %100 : vector<32x256xf32>
    %103 = arith.addf %99, %102 : vector<32x256xf32>
    %104 = vector.broadcast %91 : vector<32x1xf32> to vector<32x256xf32>
    %105 = arith.addf %103, %104 : vector<32x256xf32>
    %cst_57 = arith.constant dense<0.000000e+00> : vector<32xf32>
    %106 = vector.multi_reduction <add>, %105, %cst_57 [1] : vector<32x256xf32> to vector<32xf32>
    %107 = vector.shape_cast %106 : vector<32xf32> to vector<32x1xf32>
    %108 = arith.mulf %105, %105 : vector<32x256xf32>
    %cst_58 = arith.constant dense<0.000000e+00> : vector<32xf32>
    %109 = vector.multi_reduction <add>, %108, %cst_58 [1] : vector<32x256xf32> to vector<32xf32>
    %110 = vector.shape_cast %109 : vector<32xf32> to vector<32x1xf32>
    %cst_59 = arith.constant 3.906250e-03 : f32
    %111 = vector.broadcast %cst_59 : f32 to vector<32x1xf32>
    %112 = arith.mulf %107, %111 : vector<32x1xf32>
    %cst_60 = arith.constant 3.906250e-03 : f32
    %113 = vector.broadcast %cst_60 : f32 to vector<32x1xf32>
    %114 = arith.mulf %110, %113 : vector<32x1xf32>
    %115 = arith.mulf %112, %112 : vector<32x1xf32>
    %116 = arith.subf %114, %115 : vector<32x1xf32>
    %cst_61 = arith.constant 9.99999974E-6 : f32
    %117 = vector.broadcast %cst_61 : f32 to vector<32x1xf32>
    %118 = arith.addf %116, %117 : vector<32x1xf32>
    %119 = math.rsqrt %118 : vector<32x1xf32>
    %c1_62 = arith.constant 1 : index
    %c0_63 = arith.constant 0 : index
    %c0_64 = arith.constant 0 : index
    %120 = vector.load %arg8[%c1_62, %c0_63, %c0_64] : memref<2x32x1xf32, #tpu.memory_space<vmem>>, vector<1x32x1xf32>
    %121 = vector.shape_cast %120 : vector<1x32x1xf32> to vector<32x1xf32>
    %122 = arith.mulf %119, %121 : vector<32x1xf32>
    %c1_65 = arith.constant 1 : index
    %c0_66 = arith.constant 0 : index
    %c0_67 = arith.constant 0 : index
    %123 = vector.load %arg9[%c1_65, %c0_66, %c0_67] : memref<2x32x1xf32, #tpu.memory_space<vmem>>, vector<1x32x1xf32>
    %124 = vector.shape_cast %123 : vector<1x32x1xf32> to vector<32x1xf32>
    %125 = arith.mulf %112, %122 : vector<32x1xf32>
    %126 = arith.subf %124, %125 : vector<32x1xf32>
    %127 = vector.broadcast %122 : vector<32x1xf32> to vector<32x256xf32>
    %128 = arith.mulf %105, %127 : vector<32x256xf32>
    %129 = vector.broadcast %126 : vector<32x1xf32> to vector<32x256xf32>
    %130 = arith.addf %128, %129 : vector<32x256xf32>
    %cst_68 = arith.constant 0.000000e+00 : f32
    %131 = vector.broadcast %cst_68 : f32 to vector<32x256xf32>
    %132 = arith.maximumf %130, %131 : vector<32x256xf32>
    %c0_69 = arith.constant 0 : index
    %c0_70 = arith.constant 0 : index
    %133 = vector.load %arg10[%c0_69, %c0_70] : memref<32x32xbf16, #tpu.memory_space<vmem>>, vector<32x32xbf16>
    %c0_71 = arith.constant 0 : index
    %c0_72 = arith.constant 0 : index
    %134 = vector.load %arg11[%c0_71, %c0_72] : memref<32x32xbf16, #tpu.memory_space<vmem>>, vector<32x32xbf16>
    %c0_73 = arith.constant 0 : index
    %c0_74 = arith.constant 0 : index
    %135 = vector.load %arg12[%c0_73, %c0_74] : memref<32x32xbf16, #tpu.memory_space<vmem>>, vector<32x32xbf16>
    %c0_75 = arith.constant 0 : index
    %c0_76 = arith.constant 0 : index
    %136 = vector.load %arg13[%c0_75, %c0_76] : memref<32x1xf32, #tpu.memory_space<vmem>>, vector<32x1xf32>
    %137 = arith.truncf %132 : vector<32x256xf32> to vector<32x256xbf16>
    %cst_77 = arith.constant dense<0.000000e+00> : vector<32x256xf32>
    %138 = tpu.matmul %134, %137, %cst_77 {dimension_numbers = #tpu.dot_dimension_numbers<[1], [0], [0], [1], [0, 0, 1, 1], [], []>} : vector<32x32xbf16>, vector<32x256xbf16>, vector<32x256xf32> -> vector<32x256xf32>
    %cst_78 = arith.constant dense<0.000000e+00> : vector<32x256xf32>
    %139 = tpu.matmul %133, %137, %cst_78 {dimension_numbers = #tpu.dot_dimension_numbers<[1], [0], [0], [1], [0, 0, 1, 1], [], []>} : vector<32x32xbf16>, vector<32x256xbf16>, vector<32x256xf32> -> vector<32x256xf32>
    %cst_79 = arith.constant dense<0.000000e+00> : vector<32x256xf32>
    %140 = tpu.matmul %135, %137, %cst_79 {dimension_numbers = #tpu.dot_dimension_numbers<[1], [0], [0], [1], [0, 0, 1, 1], [], []>} : vector<32x32xbf16>, vector<32x256xbf16>, vector<32x256xf32> -> vector<32x256xf32>
    %c1_i32_80 = arith.constant 1 : i32
    %141 = tpu.dynamic_rotate %139 by %c1_i32_80 dim 1 : vector<32x256xf32>, i32 -> vector<32x256xf32>
    %142 = vector.broadcast %7 : vector<1x256xf32> to vector<32x256xf32>
    %143 = arith.mulf %142, %141 : vector<32x256xf32>
    %144 = arith.addf %138, %143 : vector<32x256xf32>
    %c255_i32_81 = arith.constant 255 : i32
    %145 = tpu.dynamic_rotate %140 by %c255_i32_81 dim 1 : vector<32x256xf32>, i32 -> vector<32x256xf32>
    %146 = vector.broadcast %12 : vector<1x256xf32> to vector<32x256xf32>
    %147 = arith.mulf %146, %145 : vector<32x256xf32>
    %148 = arith.addf %144, %147 : vector<32x256xf32>
    %149 = vector.broadcast %136 : vector<32x1xf32> to vector<32x256xf32>
    %150 = arith.addf %148, %149 : vector<32x256xf32>
    %c0_82 = arith.constant 0 : index
    %c0_83 = arith.constant 0 : index
    %151 = vector.load %arg0[%c0_82, %c0_83] : memref<1x256xf32, #tpu.memory_space<vmem>>, vector<1x256xf32>
    %152 = tpu.iota {dimensions = array<i32: 0>} : vector<12x1xi32>
    %153 = arith.sitofp %152 : vector<12x1xi32> to vector<12x1xf32>
    %cst_84 = arith.constant 6.000000e+00 : f32
    %154 = vector.broadcast %cst_84 : f32 to vector<12x1xf32>
    %155 = arith.cmpf oge, %153, %154 : vector<12x1xf32>
    %cst_85 = arith.constant 1.000000e+00 : f32
    %cst_86 = arith.constant 0.000000e+00 : f32
    %156 = vector.broadcast %cst_85 : f32 to vector<12x1xf32>
    %157 = vector.broadcast %cst_86 : f32 to vector<12x1xf32>
    %158 = arith.select %155, %156, %157 : vector<12x1xi1>, vector<12x1xf32>
    %cst_87 = arith.constant 6.000000e+00 : f32
    %159 = vector.broadcast %cst_87 : f32 to vector<12x1xf32>
    %160 = arith.mulf %158, %159 : vector<12x1xf32>
    %161 = arith.subf %153, %160 : vector<12x1xf32>
    %cst_88 = arith.constant 0.693147182 : f32
    %162 = vector.broadcast %cst_88 : f32 to vector<12x1xf32>
    %163 = arith.mulf %161, %162 : vector<12x1xf32>
    %164 = math.exp %163 : vector<12x1xf32>
    %cst_89 = arith.constant 1.57079637 : f32
    %165 = vector.broadcast %cst_89 : f32 to vector<12x1xf32>
    %166 = arith.mulf %158, %165 : vector<12x1xf32>
    %167 = vector.broadcast %164 : vector<12x1xf32> to vector<12x256xf32>
    %168 = vector.broadcast %151 : vector<1x256xf32> to vector<12x256xf32>
    %169 = arith.mulf %167, %168 : vector<12x256xf32>
    %170 = vector.broadcast %166 : vector<12x1xf32> to vector<12x256xf32>
    %171 = arith.addf %169, %170 : vector<12x256xf32>
    %172 = math.sin %171 : vector<12x256xf32>
    %c0_90 = arith.constant 0 : index
    %c0_91 = arith.constant 0 : index
    %173 = vector.load %arg14[%c0_90, %c0_91] : memref<32x32xbf16, #tpu.memory_space<vmem>>, vector<32x32xbf16>
    %174 = arith.truncf %150 : vector<32x256xf32> to vector<32x256xbf16>
    %cst_92 = arith.constant dense<0.000000e+00> : vector<32x256xf32>
    %175 = tpu.matmul %173, %174, %cst_92 {dimension_numbers = #tpu.dot_dimension_numbers<[1], [0], [0], [1], [0, 0, 1, 1], [], []>} : vector<32x32xbf16>, vector<32x256xbf16>, vector<32x256xf32> -> vector<32x256xf32>
    %c0_93 = arith.constant 0 : index
    %c0_94 = arith.constant 0 : index
    %176 = vector.load %arg16[%c0_93, %c0_94] : memref<32x12xbf16, #tpu.memory_space<vmem>>, vector<32x12xbf16>
    %177 = arith.truncf %172 : vector<12x256xf32> to vector<12x256xbf16>
    %cst_95 = arith.constant dense<0.000000e+00> : vector<32x256xf32>
    %178 = tpu.matmul %176, %177, %cst_95 {dimension_numbers = #tpu.dot_dimension_numbers<[1], [0], [0], [1], [0, 0, 1, 1], [], []>} : vector<32x12xbf16>, vector<12x256xbf16>, vector<32x256xf32> -> vector<32x256xf32>
    %179 = arith.addf %175, %178 : vector<32x256xf32>
    %c0_96 = arith.constant 0 : index
    %c0_97 = arith.constant 0 : index
    %180 = vector.load %arg15[%c0_96, %c0_97] : memref<32x1xf32, #tpu.memory_space<vmem>>, vector<32x1xf32>
    %181 = vector.broadcast %180 : vector<32x1xf32> to vector<32x256xf32>
    %182 = vector.broadcast %151 : vector<1x256xf32> to vector<32x256xf32>
    %183 = arith.mulf %181, %182 : vector<32x256xf32>
    %184 = arith.addf %179, %183 : vector<32x256xf32>
    %c0_98 = arith.constant 0 : index
    %c0_99 = arith.constant 0 : index
    %185 = vector.load %arg17[%c0_98, %c0_99] : memref<32x1xf32, #tpu.memory_space<vmem>>, vector<32x1xf32>
    %186 = vector.broadcast %185 : vector<32x1xf32> to vector<32x256xf32>
    %187 = arith.addf %184, %186 : vector<32x256xf32>
    %cst_100 = arith.constant 0.000000e+00 : f32
    %188 = vector.broadcast %cst_100 : f32 to vector<32x256xf32>
    %189 = arith.maximumf %187, %188 : vector<32x256xf32>
    %c0_101 = arith.constant 0 : index
    %c0_102 = arith.constant 0 : index
    %190 = vector.load %arg18[%c0_101, %c0_102] : memref<32x1xf32, #tpu.memory_space<vmem>>, vector<32x1xf32>
    %191 = vector.broadcast %190 : vector<32x1xf32> to vector<32x256xf32>
    %192 = arith.mulf %191, %189 : vector<32x256xf32>
    %cst_103 = arith.constant dense<0.000000e+00> : vector<256xf32>
    %193 = vector.multi_reduction <add>, %192, %cst_103 [0] : vector<32x256xf32> to vector<256xf32>
    %194 = vector.shape_cast %193 : vector<256xf32> to vector<1x256xf32>
    %c0_104 = arith.constant 0 : index
    %c0_105 = arith.constant 0 : index
    %195 = vector.load %arg19[%c0_104, %c0_105] : memref<1x1xf32, #tpu.memory_space<vmem>>, vector<1x1xf32>
    %196 = vector.broadcast %195 : vector<1x1xf32> to vector<1x256xf32>
    %197 = arith.addf %194, %196 : vector<1x256xf32>
    %c0_106 = arith.constant 0 : index
    %c0_107 = arith.constant 0 : index
    %198 = vector.load %arg20[%c0_106, %c0_107] : memref<1x256xf32, #tpu.memory_space<vmem>>, vector<1x256xf32>
    tpu.vector_store %arg20[%c0_106, %c0_107], %197 {strides = array<i32>} : memref<1x256xf32, #tpu.memory_space<vmem>>, vector<1x256xf32>,
    return
  }
}

</mosaic_0001>

<llo_original>
// kernel: tpu_custom_call.1
$region0: #{tpu_custom_call.1}
  #allocation0 [shape = 'u32[]', space=smem, size = 0x4, offset = 0x4, fixed_abs, tag = 'smem constant byte address 0x4 - core index']
  #allocation1 [shape = 'u32[72,128]{1,0:T(1,128)}', space=vmem, size = 0x9000, scoped, tag = 'internal scratch']
  #allocation2 [shape = 'f32[1,1]{1,0:T(1,128)S(1)}', space=vmem, size = 0x200, scoped, tag = 'scoped memory for tpu_custom_call.1']
  %s0 = inlined_call_operand.vmem [shape: f32[1,256], index: 0, kind: input, shape index: {}]
  %s1 = inlined_call_operand.vmem [shape: f32[1,256], index: 1, kind: input, shape index: {}]
  %s2 = inlined_call_operand.vmem [shape: f32[32,3], index: 2, kind: input, shape index: {}]
  %s3 = inlined_call_operand.vmem [shape: f32[32,1], index: 3, kind: input, shape index: {}]
  %s4 = inlined_call_operand.vmem [shape: bf16[2,32,32], index: 4, kind: input, shape index: {}]
  %s5 = inlined_call_operand.vmem [shape: bf16[2,32,32], index: 5, kind: input, shape index: {}]
  %s6 = inlined_call_operand.vmem [shape: bf16[2,32,32], index: 6, kind: input, shape index: {}]
  %s7 = inlined_call_operand.vmem [shape: f32[2,32,1], index: 7, kind: input, shape index: {}]
  %s8 = inlined_call_operand.vmem [shape: f32[2,32,1], index: 8, kind: input, shape index: {}]
  %s9 = inlined_call_operand.vmem [shape: f32[2,32,1], index: 9, kind: input, shape index: {}]
  %s10 = inlined_call_operand.vmem [shape: bf16[32,32], index: 10, kind: input, shape index: {}]
  %s11 = inlined_call_operand.vmem [shape: bf16[32,32], index: 11, kind: input, shape index: {}]
  %s12 = inlined_call_operand.vmem [shape: bf16[32,32], index: 12, kind: input, shape index: {}]
  %s13 = inlined_call_operand.vmem [shape: f32[32,1], index: 13, kind: input, shape index: {}]
  %s14 = inlined_call_operand.vmem [shape: bf16[32,32], index: 14, kind: input, shape index: {}]
  %s15 = inlined_call_operand.vmem [shape: f32[32,1], index: 15, kind: input, shape index: {}]
  %s16 = inlined_call_operand.vmem [shape: bf16[32,12], index: 16, kind: input, shape index: {}]
  %s17 = inlined_call_operand.vmem [shape: f32[32,1], index: 17, kind: input, shape index: {}]
  %s18 = inlined_call_operand.vmem [shape: f32[32,1], index: 18, kind: input, shape index: {}]
  %s19 = inlined_call_operand.<no memory space> [shape: f32[1,1], index: 19, kind: input, shape index: {}]
  %s20 = inlined_call_operand.hbm [shape: f32[1,256], index: 20, kind: output, shape index: {}]
  %s21 = sld [smem:[#allocation0]]
  $region90: #{tpu_custom_call.1} parent=0
    _
  %s23 = ssub.s32 1, %s21
  %s24 = scalar_select 0, %s23, %s21
  %v25 = vstv %s19
  %26 = vst [vmem:[#allocation2] sm:$0x1] %v25
  $region1: #{tpu_custom_call.1} parent=0
    #allocation3 [shape = 'u8[1024]{0}', space=vmem, size = 0x400, scoped, tag = 'output window, operand 0, single buffered']
    #allocation4 [shape = 's32[1]{0}', space=sflag, size = 0x4, scoped, tag = 'scoped memory for tpu_custom_call.1']
    %27 = vsyncpa [#allocation4], 0
    // Predicated region
    $region2: #{tpu_custom_call.1} parent=1 // pred_check
      _
    $region3: #{tpu_custom_call.1} parent=1 // pred_check_branch
      %29 = sbr.rel (0) target = $region5
    $region4: #{tpu_custom_call.1} parent=1 // pred_region
      _
    $region5: #{tpu_custom_call.1} parent=1 // pred_fallthru
      _
    // Predicated region
    $region6: #{tpu_custom_call.1} parent=1 // pred_check
      _
    $region7: #{tpu_custom_call.1} parent=1 // pred_check_branch
      %31 = sbr.rel (0) target = $region9
    $region8: #{tpu_custom_call.1} parent=1 // pred_region
      _
    $region9: #{tpu_custom_call.1} parent=1 // pred_fallthru
      _
    // Predicated region
    $region10: #{tpu_custom_call.1} parent=1 // pred_check
      _
    $region11: #{tpu_custom_call.1} parent=1 // pred_check_branch
      %33 = sbr.rel (0) target = $region13
    $region12: #{tpu_custom_call.1} parent=1 // pred_region
      _
    $region13: #{tpu_custom_call.1} parent=1 // pred_fallthru
      _
    // Predicated region
    $region14: #{tpu_custom_call.1} parent=1 // pred_check
      _
    $region15: #{tpu_custom_call.1} parent=1 // pred_check_branch
      %35 = sbr.rel (0) target = $region17
    $region16: #{tpu_custom_call.1} parent=1 // pred_region
      _
    $region17: #{tpu_custom_call.1} parent=1 // pred_fallthru
      _
    // Predicated region
    $region18: #{tpu_custom_call.1} parent=1 // pred_check
      _
    $region19: #{tpu_custom_call.1} parent=1 // pred_check_branch
      %37 = sbr.rel (0) target = $region21
    $region20: #{tpu_custom_call.1} parent=1 // pred_region
      _
    $region21: #{tpu_custom_call.1} parent=1 // pred_fallthru
      _
    // Predicated region
    $region22: #{tpu_custom_call.1} parent=1 // pred_check
      _
    $region23: #{tpu_custom_call.1} parent=1 // pred_check_branch
      %39 = sbr.rel (0) target = $region25
    $region24: #{tpu_custom_call.1} parent=1 // pred_region
      _
    $region25: #{tpu_custom_call.1} parent=1 // pred_fallthru
      _
    // Predicated region
    $region26: #{tpu_custom_call.1} parent=1 // pred_check
      _
    $region27: #{tpu_custom_call.1} parent=1 // pred_check_branch
      %41 = sbr.rel (0) target = $region29
    $region28: #{tpu_custom_call.1} parent=1 // pred_region
      _
    $region29: #{tpu_custom_call.1} parent=1 // pred_fallthru
      _
    // Predicated region
    $region30: #{tpu_custom_call.1} parent=1 // pred_check
      _
    $region31: #{tpu_custom_call.1} parent=1 // pred_check_branch
      %43 = sbr.rel (0) target = $region33
    $region32: #{tpu_custom_call.1} parent=1 // pred_region
      _
    $region33: #{tpu_custom_call.1} parent=1 // pred_fallthru
      _
    // Predicated region
    $region34: #{tpu_custom_call.1} parent=1 // pred_check
      _
    $region35: #{tpu_custom_call.1} parent=1 // pred_check_branch
      %45 = sbr.rel (0) target = $region37
    $region36: #{tpu_custom_call.1} parent=1 // pred_region
      _
    $region37: #{tpu_custom_call.1} parent=1 // pred_fallthru
      _
    // Predicated region
    $region38: #{tpu_custom_call.1} parent=1 // pred_check
      _
    $region39: #{tpu_custom_call.1} parent=1 // pred_check_branch
      %47 = sbr.rel (0) target = $region41
    $region40: #{tpu_custom_call.1} parent=1 // pred_region
      _
    $region41: #{tpu_custom_call.1} parent=1 // pred_fallthru
      _
    // Predicated region
    $region42: #{tpu_custom_call.1} parent=1 // pred_check
      _
    $region43: #{tpu_custom_call.1} parent=1 // pred_check_branch
      %49 = sbr.rel (0) target = $region45
    $region44: #{tpu_custom_call.1} parent=1 // pred_region
      _
    $region45: #{tpu_custom_call.1} parent=1 // pred_fallthru
      _
    // Predicated region
    $region46: #{tpu_custom_call.1} parent=1 // pred_check
      _
    $region47: #{tpu_custom_call.1} parent=1 // pred_check_branch
      %51 = sbr.rel (0) target = $region49
    $region48: #{tpu_custom_call.1} parent=1 // pred_region
      _
    $region49: #{tpu_custom_call.1} parent=1 // pred_fallthru
      _
    // Predicated region
    $region50: #{tpu_custom_call.1} parent=1 // pred_check
      _
    $region51: #{tpu_custom_call.1} parent=1 // pred_check_branch
      %53 = sbr.rel (0) target = $region53
    $region52: #{tpu_custom_call.1} parent=1 // pred_region
      _
    $region53: #{tpu_custom_call.1} parent=1 // pred_fallthru
      _
    // Predicated region
    $region54: #{tpu_custom_call.1} parent=1 // pred_check
      _
    $region55: #{tpu_custom_call.1} parent=1 // pred_check_branch
      %55 = sbr.rel (0) target = $region57
    $region56: #{tpu_custom_call.1} parent=1 // pred_region
      _
    $region57: #{tpu_custom_call.1} parent=1 // pred_fallthru
      _
    // Predicated region
    $region58: #{tpu_custom_call.1} parent=1 // pred_check
      _
    $region59: #{tpu_custom_call.1} parent=1 // pred_check_branch
      %57 = sbr.rel (0) target = $region61
    $region60: #{tpu_custom_call.1} parent=1 // pred_region
      _
    $region61: #{tpu_custom_call.1} parent=1 // pred_fallthru
      _
    // Predicated region
    $region62: #{tpu_custom_call.1} parent=1 // pred_check
      _
    $region63: #{tpu_custom_call.1} parent=1 // pred_check_branch
      %59 = sbr.rel (0) target = $region65
    $region64: #{tpu_custom_call.1} parent=1 // pred_region
      _
    $region65: #{tpu_custom_call.1} parent=1 // pred_fallthru
      _
    // Predicated region
    $region66: #{tpu_custom_call.1} parent=1 // pred_check
      _
    $region67: #{tpu_custom_call.1} parent=1 // pred_check_branch
      %61 = sbr.rel (0) target = $region69
    $region68: #{tpu_custom_call.1} parent=1 // pred_region
      _
    $region69: #{tpu_custom_call.1} parent=1 // pred_fallthru
      _
    // Predicated region
    $region70: #{tpu_custom_call.1} parent=1 // pred_check
      _
    $region71: #{tpu_custom_call.1} parent=1 // pred_check_branch
      %63 = sbr.rel (0) target = $region73
    $region72: #{tpu_custom_call.1} parent=1 // pred_region
      _
    $region73: #{tpu_custom_call.1} parent=1 // pred_fallthru
      _
    // Predicated region
    $region74: #{tpu_custom_call.1} parent=1 // pred_check
      _
    $region75: #{tpu_custom_call.1} parent=1 // pred_check_branch
      %65 = sbr.rel (0) target = $region77
    $region76: #{tpu_custom_call.1} parent=1 // pred_region
      _
    $region77: #{tpu_custom_call.1} parent=1 // pred_fallthru
      _
    // Predicated region
    $region78: #{tpu_custom_call.1} parent=1 // pred_check
      _
    $region79: #{tpu_custom_call.1} parent=1 // pred_check_branch
      %67 = sbr.rel (0) target = $region81
    $region80: #{tpu_custom_call.1} parent=1 // pred_region
      _
    $region81: #{tpu_custom_call.1} parent=1 // pred_fallthru
      _
    %v69 = vlaneseq
    %v70 = vand.u32 %v69, 127
    %v71 = vadd.s32 %v70, 128
    %v72 = vand.u32 %v70, 127
    %v73 = vand.u32 %v71, 127
    %vm74 = vcmp.ge.s32.totalorder %v72, 1
    %vm75 = vcmp.ge.s32.totalorder %v73, 1
    %v76 = vsel %vm74, 1.0, 0.0
    %v77 = vsel %vm75, 1.0, 0.0
    %vm78 = vcmp.le.s32.totalorder %v72, 126
    %vm79 = vcmp.le.s32.totalorder %v73, 126
    %v80 = vsel %vm78, 1.0, 0.0
    %v81 = vsel %vm79, 1.0, 0.0
    %v82 = vld [vmem:[%s1] sm:$0x3]
    %v84 = vperm.slane %v82, 0
    %v85 = vperm.slane %v82, 1
    %88 = vrot.lane.b32.xlu0 %v84, 1
    %v89 = vpop.permute.xlu0 %88
    %90 = vrot.lane.b32.xlu0 %v85, 1
    %v91 = vpop.permute.xlu0 %90
    %vm92 = vcmp.lt.s32.totalorder %v70, 1
    %v93 = vsel %vm92, %v89, %v91
    %v94 = vsel %vm92, %v91, %v89
    %v95 = vmul.f32 %v94, %v76
    %v96 = vmul.f32 %v93, %v77
    %97 = vrot.lane.b32.xlu0 %v84, 127
    %v98 = vpop.permute.xlu0 %97
    %99 = vrot.lane.b32.xlu0 %v85, 127
    %v100 = vpop.permute.xlu0 %99
    %vm101 = vcmp.lt.s32.totalorder %v70, 127
    %v102 = vsel %vm101, %v98, %v100
    %v103 = vsel %vm101, %v100, %v98
    %v104 = vmul.f32 %v102, %v80
    %v105 = vmul.f32 %v103, %v81
    %v106 = vld [vmem:[%s2] sm:$0xff]
    %v107 = vld [vmem:[%s2 + $0x8] sm:$0xff]
    %v108 = vld [vmem:[%s2 + $0x10] sm:$0xff]
    %v109 = vld [vmem:[%s2 + $0x18] sm:$0xff]
    %111 = vset.pattern.permute.xlu0 0
    %112 = vperm.xlu0 %111, %v106
    %v113 = vpop.permute.xlu0 %112
    %116 = vset.pattern.permute.xlu0 0
    %117 = vperm.xlu0 %116, %v107
    %v118 = vpop.permute.xlu0 %117
    %121 = vset.pattern.permute.xlu0 0
    %122 = vperm.xlu0 %121, %v108
    %v123 = vpop.permute.xlu0 %122
    %126 = vset.pattern.permute.xlu0 0
    %127 = vperm.xlu0 %126, %v109
    %v128 = vpop.permute.xlu0 %127
    %v130 = vperm.slane %v95, 0
    %v131 = vperm.slane %v96, 0
    %v132 = vmul.f32 %v113, %v130
    %v133 = vmul.f32 %v113, %v131
    %v134 = vmul.f32 %v118, %v130
    %v135 = vmul.f32 %v118, %v131
    %v136 = vmul.f32 %v123, %v130
    %v137 = vmul.f32 %v123, %v131
    %v138 = vmul.f32 %v128, %v130
    %v139 = vmul.f32 %v128, %v131
    %140 = vset.pattern.permute.xlu0 1
    %141 = vperm.xlu0 %140, %v106
    %v142 = vpop.permute.xlu0 %141
    %144 = vset.pattern.permute.xlu0 1
    %145 = vperm.xlu0 %144, %v107
    %v146 = vpop.permute.xlu0 %145
    %148 = vset.pattern.permute.xlu0 1
    %149 = vperm.xlu0 %148, %v108
    %v150 = vpop.permute.xlu0 %149
    %152 = vset.pattern.permute.xlu0 1
    %153 = vperm.xlu0 %152, %v109
    %v154 = vpop.permute.xlu0 %153
    %v156 = vmul.f32 %v142, %v84
    %v157 = vmul.f32 %v142, %v85
    %v158 = vmul.f32 %v146, %v84
    %v159 = vmul.f32 %v146, %v85
    %v160 = vmul.f32 %v150, %v84
    %v161 = vmul.f32 %v150, %v85
    %v162 = vmul.f32 %v154, %v84
    %v163 = vmul.f32 %v154, %v85
    %v164 = vadd.f32 %v132, %v156
    %v165 = vadd.f32 %v133, %v157
    %v166 = vadd.f32 %v134, %v158
    %v167 = vadd.f32 %v135, %v159
    %v168 = vadd.f32 %v136, %v160
    %v169 = vadd.f32 %v137, %v161
    %v170 = vadd.f32 %v138, %v162
    %v171 = vadd.f32 %v139, %v163
    %172 = vset.pattern.permute.xlu0 2
    %173 = vperm.xlu0 %172, %v106
    %v174 = vpop.permute.xlu0 %173
    %176 = vset.pattern.permute.xlu0 2
    %177 = vperm.xlu0 %176, %v107
    %v178 = vpop.permute.xlu0 %177
    %180 = vset.pattern.permute.xlu0 2
    %181 = vperm.xlu0 %180, %v108
    %v182 = vpop.permute.xlu0 %181
    %184 = vset.pattern.permute.xlu0 2
    %185 = vperm.xlu0 %184, %v109
    %v186 = vpop.permute.xlu0 %185
    %v188 = vperm.slane %v104, 0
    %v189 = vperm.slane %v105, 0
    %v190 = vmul.f32 %v174, %v188
    %v191 = vmul.f32 %v174, %v189
    %v192 = vmul.f32 %v178, %v188
    %v193 = vmul.f32 %v178, %v189
    %v194 = vmul.f32 %v182, %v188
    %v195 = vmul.f32 %v182, %v189
    %v196 = vmul.f32 %v186, %v188
    %v197 = vmul.f32 %v186, %v189
    %v198 = vadd.f32 %v164, %v190
    %v199 = vadd.f32 %v165, %v191
    %v200 = vadd.f32 %v166, %v192
    %v201 = vadd.f32 %v167, %v193
    %v202 = vadd.f32 %v168, %v194
    %v203 = vadd.f32 %v169, %v195
    %v204 = vadd.f32 %v170, %v196
    %v205 = vadd.f32 %v171, %v197
    %v206 = vld [vmem:[%s3] sm:$0xff]
    %v207 = vld [vmem:[%s3 + $0x8] sm:$0xff]
    %v208 = vld [vmem:[%s3 + $0x10] sm:$0xff]
    %v209 = vld [vmem:[%s3 + $0x18] sm:$0xff]
    %211 = vset.pattern.permute.xlu0 0
    %212 = vperm.xlu0 %211, %v206
    %v213 = vpop.permute.xlu0 %212
    %216 = vset.pattern.permute.xlu0 0
    %217 = vperm.xlu0 %216, %v207
    %v218 = vpop.permute.xlu0 %217
    %221 = vset.pattern.permute.xlu0 0
    %222 = vperm.xlu0 %221, %v208
    %v223 = vpop.permute.xlu0 %222
    %226 = vset.pattern.permute.xlu0 0
    %227 = vperm.xlu0 %226, %v209
    %v228 = vpop.permute.xlu0 %227
    %v230 = vadd.f32 %v198, %v213
    %v231 = vadd.f32 %v199, %v213
    %v232 = vadd.f32 %v200, %v218
    %v233 = vadd.f32 %v201, %v218
    %v234 = vadd.f32 %v202, %v223
    %v235 = vadd.f32 %v203, %v223
    %v236 = vadd.f32 %v204, %v228
    %v237 = vadd.f32 %v205, %v228
    %v238 = vld [vmem:[%s4] sm:$0xf]
    %v239 = vld [vmem:[%s4 + $0x4] sm:$0xf]
    %v240 = vld [vmem:[%s4 + $0x8] sm:$0xf]
    %v241 = vld [vmem:[%s4 + $0xc] sm:$0xf]
    %v242 = vld [vmem:[%s5] sm:$0xf]
    %v243 = vld [vmem:[%s5 + $0x4] sm:$0xf]
    %v244 = vld [vmem:[%s5 + $0x8] sm:$0xf]
    %v245 = vld [vmem:[%s5 + $0xc] sm:$0xf]
    %v246 = vld [vmem:[%s6] sm:$0xf]
    %v247 = vld [vmem:[%s6 + $0x4] sm:$0xf]
    %v248 = vld [vmem:[%s6 + $0x8] sm:$0xf]
    %v249 = vld [vmem:[%s6 + $0xc] sm:$0xf]
    %v250 = vld [vmem:[%s7] sm:$0xff]
    %v251 = vld [vmem:[%s7 + $0x8] sm:$0xff]
    %v252 = vld [vmem:[%s7 + $0x10] sm:$0xff]
    %v253 = vld [vmem:[%s7 + $0x18] sm:$0xff]
    %v254 = vpack.c.bf16 %v232, %v230
    %v255 = vpack.c.bf16 %v233, %v231
    %v256 = vpack.c.bf16 %v236, %v234
    %v257 = vpack.c.bf16 %v237, %v235
    %v262 = vunpack.c.l.b16 %v238
    %v263 = vunpack.c.l.b16 %v239
    %v264 = vunpack.c.l.b16 %v240
    %v265 = vunpack.c.l.b16 %v241
    %v266 = vpack.c.b16 %v263, %v262
    %v267 = vpack.c.b16 %v265, %v264
    %vm268 = vcmask 261120
    %v270 = vsel %vm268, %v266, 0
    %v273 = vsel %vm268, %v267, 0
    %275 = vmatpush.bf16.msra.mxu0 0
    %276 = vmatpush.bf16.msra.mxu0 0
    %277 = vmatpush.bf16.msra.mxu0 0
    %278 = vmatpush.bf16.msra.mxu0 0
    %279 = vmatpush.bf16.msra.mxu0 0
    %280 = vmatpush.bf16.msra.mxu0 0
    %281 = vmatpush.bf16.msra.mxu0 %v256
    %282 = vmatpush.bf16.msra.mxu0 %v254
    %283 = vmatmul.bf16.gmra.mxu0 %v270
    %v284 = vpop.f32.mrf.mxu0
    %v285 = vadd.f32 0.0, %v284
    %v286 = vpop.f32.mrf.mxu0
    %v287 = vadd.f32 0.0, %v286
    %288 = vmatmul.bf16.gmra.mxu0 %v273
    %v289 = vpop.f32.mrf.mxu0
    %v290 = vadd.f32 0.0, %v289
    %v291 = vpop.f32.mrf.mxu0
    %v292 = vadd.f32 0.0, %v291
    %293 = vdwg.mxu0
    %294 = vmatpush.bf16.msra.mxu0 0
    %295 = vmatpush.bf16.msra.mxu0 0
    %296 = vmatpush.bf16.msra.mxu0 0
    %297 = vmatpush.bf16.msra.mxu0 0
    %298 = vmatpush.bf16.msra.mxu0 0
    %299 = vmatpush.bf16.msra.mxu0 0
    %300 = vmatpush.bf16.msra.mxu0 %v257
    %301 = vmatpush.bf16.msra.mxu0 %v255
    %302 = vmatmul.bf16.gmra.mxu0 %v270
    %v303 = vpop.f32.mrf.mxu0
    %v304 = vadd.f32 0.0, %v303
    %v305 = vpop.f32.mrf.mxu0
    %v306 = vadd.f32 0.0, %v305
    %307 = vmatmul.bf16.gmra.mxu0 %v273
    %v308 = vpop.f32.mrf.mxu0
    %v309 = vadd.f32 0.0, %v308
    %v310 = vpop.f32.mrf.mxu0
    %v311 = vadd.f32 0.0, %v310
    %312 = vdwg.mxu0
    %v317 = vunpack.c.l.b16 %v246
    %v318 = vunpack.c.l.b16 %v247
    %v319 = vunpack.c.l.b16 %v248
    %v320 = vunpack.c.l.b16 %v249
    %v321 = vpack.c.b16 %v318, %v317
    %v322 = vpack.c.b16 %v320, %v319
    %v324 = vsel %vm268, %v321, 0
    %v327 = vsel %vm268, %v322, 0
    %329 = vmatpush.bf16.msra.mxu0 0
    %330 = vmatpush.bf16.msra.mxu0 0
    %331 = vmatpush.bf16.msra.mxu0 0
    %332 = vmatpush.bf16.msra.mxu0 0
    %333 = vmatpush.bf16.msra.mxu0 0
    %334 = vmatpush.bf16.msra.mxu0 0
    %335 = vmatpush.bf16.msra.mxu0 %v256
    %336 = vmatpush.bf16.msra.mxu0 %v254
    %337 = vmatmul.bf16.gmra.mxu0 %v324
    %v338 = vpop.f32.mrf.mxu0
    %v339 = vadd.f32 0.0, %v338
    %v340 = vpop.f32.mrf.mxu0
    %v341 = vadd.f32 0.0, %v340
    %342 = vmatmul.bf16.gmra.mxu0 %v327
    %v343 = vpop.f32.mrf.mxu0
    %v344 = vadd.f32 0.0, %v343
    %v345 = vpop.f32.mrf.mxu0
    %v346 = vadd.f32 0.0, %v345
    %347 = vdwg.mxu0
    %348 = vmatpush.bf16.msra.mxu0 0
    %349 = vmatpush.bf16.msra.mxu0 0
    %350 = vmatpush.bf16.msra.mxu0 0
    %351 = vmatpush.bf16.msra.mxu0 0
    %352 = vmatpush.bf16.msra.mxu0 0
    %353 = vmatpush.bf16.msra.mxu0 0
    %354 = vmatpush.bf16.msra.mxu0 %v257
    %355 = vmatpush.bf16.msra.mxu0 %v255
    %356 = vmatmul.bf16.gmra.mxu0 %v324
    %v357 = vpop.f32.mrf.mxu0
    %v358 = vadd.f32 0.0, %v357
    %v359 = vpop.f32.mrf.mxu0
    %v360 = vadd.f32 0.0, %v359
    %361 = vmatmul.bf16.gmra.mxu0 %v327
    %v362 = vpop.f32.mrf.mxu0
    %v363 = vadd.f32 0.0, %v362
    %v364 = vpop.f32.mrf.mxu0
    %v365 = vadd.f32 0.0, %v364
    %366 = vdwg.mxu0
    %367 = vrot.lane.b32.xlu0 %v285, 1
    %v368 = vpop.permute.xlu0 %367
    %369 = vrot.lane.b32.xlu0 %v287, 1
    %v370 = vpop.permute.xlu0 %369
    %371 = vrot.lane.b32.xlu0 %v290, 1
    %v372 = vpop.permute.xlu0 %371
    %373 = vrot.lane.b32.xlu0 %v292, 1
    %v374 = vpop.permute.xlu0 %373
    %375 = vrot.lane.b32.xlu0 %v304, 1
    %v376 = vpop.permute.xlu0 %375
    %377 = vrot.lane.b32.xlu0 %v306, 1
    %v378 = vpop.permute.xlu0 %377
    %379 = vrot.lane.b32.xlu0 %v309, 1
    %v380 = vpop.permute.xlu0 %379
    %381 = vrot.lane.b32.xlu0 %v311, 1
    %v382 = vpop.permute.xlu0 %381
    %v383 = vsel %vm92, %v368, %v376
    %v384 = vsel %vm92, %v370, %v378
    %v385 = vsel %vm92, %v372, %v380
    %v386 = vsel %vm92, %v374, %v382
    %v387 = vsel %vm92, %v376, %v368
    %v388 = vsel %vm92, %v378, %v370
    %v389 = vsel %vm92, %v380, %v372
    %v390 = vsel %vm92, %v382, %v374
    %v391 = vmul.f32 %v76, %v387
    %v392 = vmul.f32 %v77, %v383
    %v393 = vmul.f32 %v76, %v388
    %v394 = vmul.f32 %v77, %v384
    %v395 = vmul.f32 %v76, %v389
    %v396 = vmul.f32 %v77, %v385
    %v397 = vmul.f32 %v76, %v390
    %v398 = vmul.f32 %v77, %v386
    %v403 = vunpack.c.l.b16 %v242
    %v404 = vunpack.c.l.b16 %v243
    %v405 = vunpack.c.l.b16 %v244
    %v406 = vunpack.c.l.b16 %v245
    %v407 = vpack.c.b16 %v404, %v403
    %v408 = vpack.c.b16 %v406, %v405
    %v410 = vsel %vm268, %v407, 0
    %v413 = vsel %vm268, %v408, 0
    %415 = vmatpush.bf16.msra.mxu0 0
    %416 = vmatpush.bf16.msra.mxu0 0
    %417 = vmatpush.bf16.msra.mxu0 0
    %418 = vmatpush.bf16.msra.mxu0 0
    %419 = vmatpush.bf16.msra.mxu0 0
    %420 = vmatpush.bf16.msra.mxu0 0
    %421 = vmatpush.bf16.msra.mxu0 %v256
    %422 = vmatpush.bf16.msra.mxu0 %v254
    %423 = vmatmul.bf16.gmra.mxu0 %v410
    %v424 = vpop.f32.mrf.mxu0
    %v425 = vadd.f32 %v391, %v424
    %v426 = vpop.f32.mrf.mxu0
    %v427 = vadd.f32 %v393, %v426
    %428 = vmatmul.bf16.gmra.mxu0 %v413
    %v429 = vpop.f32.mrf.mxu0
    %v430 = vadd.f32 %v395, %v429
    %v431 = vpop.f32.mrf.mxu0
    %v432 = vadd.f32 %v397, %v431
    %433 = vdwg.mxu0
    %434 = vmatpush.bf16.msra.mxu0 0
    %435 = vmatpush.bf16.msra.mxu0 0
    %436 = vmatpush.bf16.msra.mxu0 0
    %437 = vmatpush.bf16.msra.mxu0 0
    %438 = vmatpush.bf16.msra.mxu0 0
    %439 = vmatpush.bf16.msra.mxu0 0
    %440 = vmatpush.bf16.msra.mxu0 %v257
    %441 = vmatpush.bf16.msra.mxu0 %v255
    %442 = vmatmul.bf16.gmra.mxu0 %v410
    %v443 = vpop.f32.mrf.mxu0
    %v444 = vadd.f32 %v392, %v443
    %v445 = vpop.f32.mrf.mxu0
    %v446 = vadd.f32 %v394, %v445
    %447 = vmatmul.bf16.gmra.mxu0 %v413
    %v448 = vpop.f32.mrf.mxu0
    %v449 = vadd.f32 %v396, %v448
    %v450 = vpop.f32.mrf.mxu0
    %v451 = vadd.f32 %v398, %v450
    %452 = vdwg.mxu0
    %453 = vrot.lane.b32.xlu0 %v339, 127
    %v454 = vpop.permute.xlu0 %453
    %455 = vrot.lane.b32.xlu0 %v341, 127
    %v456 = vpop.permute.xlu0 %455
    %457 = vrot.lane.b32.xlu0 %v344, 127
    %v458 = vpop.permute.xlu0 %457
    %459 = vrot.lane.b32.xlu0 %v346, 127
    %v460 = vpop.permute.xlu0 %459
    %461 = vrot.lane.b32.xlu0 %v358, 127
    %v462 = vpop.permute.xlu0 %461
    %463 = vrot.lane.b32.xlu0 %v360, 127
    %v464 = vpop.permute.xlu0 %463
    %465 = vrot.lane.b32.xlu0 %v363, 127
    %v466 = vpop.permute.xlu0 %465
    %467 = vrot.lane.b32.xlu0 %v365, 127
    %v468 = vpop.permute.xlu0 %467
    %v469 = vsel %vm101, %v454, %v462
    %v470 = vsel %vm101, %v456, %v464
    %v471 = vsel %vm101, %v458, %v466
    %v472 = vsel %vm101, %v460, %v468
    %v473 = vsel %vm101, %v462, %v454
    %v474 = vsel %vm101, %v464, %v456
    %v475 = vsel %vm101, %v466, %v458
    %v476 = vsel %vm101, %v468, %v460
    %v477 = vmul.f32 %v80, %v469
    %v478 = vmul.f32 %v81, %v473
    %v479 = vmul.f32 %v80, %v470
    %v480 = vmul.f32 %v81, %v474
    %v481 = vmul.f32 %v80, %v471
    %v482 = vmul.f32 %v81, %v475
    %v483 = vmul.f32 %v80, %v472
    %v484 = vmul.f32 %v81, %v476
    %v485 = vadd.f32 %v425, %v477
    %v486 = vadd.f32 %v444, %v478
    %v487 = vadd.f32 %v427, %v479
    %v488 = vadd.f32 %v446, %v480
    %v489 = vadd.f32 %v430, %v481
    %v490 = vadd.f32 %v449, %v482
    %v491 = vadd.f32 %v432, %v483
    %v492 = vadd.f32 %v451, %v484
    %494 = vset.pattern.permute.xlu0 0
    %495 = vperm.xlu0 %494, %v250
    %v496 = vpop.permute.xlu0 %495
    %499 = vset.pattern.permute.xlu0 0
    %500 = vperm.xlu0 %499, %v251
    %v501 = vpop.permute.xlu0 %500
    %504 = vset.pattern.permute.xlu0 0
    %505 = vperm.xlu0 %504, %v252
    %v506 = vpop.permute.xlu0 %505
    %509 = vset.pattern.permute.xlu0 0
    %510 = vperm.xlu0 %509, %v253
    %v511 = vpop.permute.xlu0 %510
    %v513 = vadd.f32 %v485, %v496
    %v514 = vadd.f32 %v486, %v496
    %v515 = vadd.f32 %v487, %v501
    %v516 = vadd.f32 %v488, %v501
    %v517 = vadd.f32 %v489, %v506
    %v518 = vadd.f32 %v490, %v506
    %v519 = vadd.f32 %v491, %v511
    %v520 = vadd.f32 %v492, %v511
    %v521 = vadd.f32 %v513, %v514
    %522 = vadd.xlane.f32.xlu0 %v521
    %v523 = vpop.xlane.xlu0 %522
    %v524 = vadd.f32 %v515, %v516
    %525 = vadd.xlane.f32.xlu0 %v524
    %v526 = vpop.xlane.xlu0 %525
    %v527 = vadd.f32 %v517, %v518
    %528 = vadd.xlane.f32.xlu0 %v527
    %v529 = vpop.xlane.xlu0 %528
    %v530 = vadd.f32 %v519, %v520
    %531 = vadd.xlane.f32.xlu0 %v530
    %v532 = vpop.xlane.xlu0 %531
    %v533 = vmul.f32 %v513, %v513
    %v534 = vmul.f32 %v514, %v514
    %v535 = vmul.f32 %v515, %v515
    %v536 = vmul.f32 %v516, %v516
    %v537 = vmul.f32 %v517, %v517
    %v538 = vmul.f32 %v518, %v518
    %v539 = vmul.f32 %v519, %v519
    %v540 = vmul.f32 %v520, %v520
    %v541 = vadd.f32 %v533, %v534
    %542 = vadd.xlane.f32.xlu0 %v541
    %v543 = vpop.xlane.xlu0 %542
    %v544 = vadd.f32 %v535, %v536
    %545 = vadd.xlane.f32.xlu0 %v544
    %v546 = vpop.xlane.xlu0 %545
    %v547 = vadd.f32 %v537, %v538
    %548 = vadd.xlane.f32.xlu0 %v547
    %v549 = vpop.xlane.xlu0 %548
    %v550 = vadd.f32 %v539, %v540
    %551 = vadd.xlane.f32.xlu0 %v550
    %v552 = vpop.xlane.xlu0 %551
    %v553 = vmul.f32 %v523, 0.00390625
    %v554 = vmul.f32 %v526, 0.00390625
    %v555 = vmul.f32 %v529, 0.00390625
    %v556 = vmul.f32 %v532, 0.00390625
    %v557 = vmul.f32 %v543, 0.00390625
    %v558 = vmul.f32 %v546, 0.00390625
    %v559 = vmul.f32 %v549, 0.00390625
    %v560 = vmul.f32 %v552, 0.00390625
    %v561 = vmul.f32 %v553, %v553
    %v562 = vmul.f32 %v554, %v554
    %v563 = vmul.f32 %v555, %v555
    %v564 = vmul.f32 %v556, %v556
    %v565 = vsub.f32 %v557, %v561
    %v566 = vsub.f32 %v558, %v562
    %v567 = vsub.f32 %v559, %v563
    %v568 = vsub.f32 %v560, %v564
    %v569 = vadd.f32 %v565, 1e-05
    %v570 = vadd.f32 %v566, 1e-05
    %v571 = vadd.f32 %v567, 1e-05
    %v572 = vadd.f32 %v568, 1e-05
    %v573 = vrsqrt.pop %v569
    %v574 = vmul.f32 %v573, %v569
    %v575 = vmul.f32 %v574, %v573
    %v576 = vmul.f32 0.5, %v575
    %v577 = vsub.f32 1.5, %v576
    %v578 = vmul.f32 %v573, %v577
    %vm579 = vweird.f32 %v569
    %vm580 = vweird.f32 %v573
    %vm581 = vmor %vm579, %vm580
    %v582 = vsel %vm581, %v573, %v578
    %v583 = vrsqrt.pop %v570
    %v584 = vmul.f32 %v583, %v570
    %v585 = vmul.f32 %v584, %v583
    %v586 = vmul.f32 0.5, %v585
    %v587 = vsub.f32 1.5, %v586
    %v588 = vmul.f32 %v583, %v587
    %vm589 = vweird.f32 %v570
    %vm590 = vweird.f32 %v583
    %vm591 = vmor %vm589, %vm590
    %v592 = vsel %vm591, %v583, %v588
    %v593 = vrsqrt.pop %v571
    %v594 = vmul.f32 %v593, %v571
    %v595 = vmul.f32 %v594, %v593
    %v596 = vmul.f32 0.5, %v595
    %v597 = vsub.f32 1.5, %v596
    %v598 = vmul.f32 %v593, %v597
    %vm599 = vweird.f32 %v571
    %vm600 = vweird.f32 %v593
    %vm601 = vmor %vm599, %vm600
    %v602 = vsel %vm601, %v593, %v598
    %v603 = vrsqrt.pop %v572
    %v604 = vmul.f32 %v603, %v572
    %v605 = vmul.f32 %v604, %v603
    %v606 = vmul.f32 0.5, %v605
    %v607 = vsub.f32 1.5, %v606
    %v608 = vmul.f32 %v603, %v607
    %vm609 = vweird.f32 %v572
    %vm610 = vweird.f32 %v603
    %vm611 = vmor %vm609, %vm610
    %v612 = vsel %vm611, %v603, %v608
    %v613 = vld [vmem:[%s8] sm:$0xff]
    %v614 = vld [vmem:[%s8 + $0x8] sm:$0xff]
    %v615 = vld [vmem:[%s8 + $0x10] sm:$0xff]
    %v616 = vld [vmem:[%s8 + $0x18] sm:$0xff]
    %v617 = vmul.f32 %v582, %v613
    %v618 = vmul.f32 %v592, %v614
    %v619 = vmul.f32 %v602, %v615
    %v620 = vmul.f32 %v612, %v616
    %v621 = vld [vmem:[%s9] sm:$0xff]
    %v622 = vld [vmem:[%s9 + $0x8] sm:$0xff]
    %v623 = vld [vmem:[%s9 + $0x10] sm:$0xff]
    %v624 = vld [vmem:[%s9 + $0x18] sm:$0xff]
    %v625 = vmul.f32 %v553, %v617
    %v626 = vmul.f32 %v554, %v618
    %v627 = vmul.f32 %v555, %v619
    %v628 = vmul.f32 %v556, %v620
    %v629 = vsub.f32 %v621, %v625
    %v630 = vsub.f32 %v622, %v626
    %v631 = vsub.f32 %v623, %v627
    %v632 = vsub.f32 %v624, %v628
    %634 = vset.pattern.permute.xlu0 0
    %635 = vperm.xlu0 %634, %v617
    %v636 = vpop.permute.xlu0 %635
    %639 = vset.pattern.permute.xlu0 0
    %640 = vperm.xlu0 %639, %v618
    %v641 = vpop.permute.xlu0 %640
    %644 = vset.pattern.permute.xlu0 0
    %645 = vperm.xlu0 %644, %v619
    %v646 = vpop.permute.xlu0 %645
    %649 = vset.pattern.permute.xlu0 0
    %650 = vperm.xlu0 %649, %v620
    %v651 = vpop.permute.xlu0 %650
    %v653 = vmul.f32 %v513, %v636
    %v654 = vmul.f32 %v514, %v636
    %v655 = vmul.f32 %v515, %v641
    %v656 = vmul.f32 %v516, %v641
    %v657 = vmul.f32 %v517, %v646
    %v658 = vmul.f32 %v518, %v646
    %v659 = vmul.f32 %v519, %v651
    %v660 = vmul.f32 %v520, %v651
    %662 = vset.pattern.permute.xlu0 0
    %663 = vperm.xlu0 %662, %v629
    %v664 = vpop.permute.xlu0 %663
    %667 = vset.pattern.permute.xlu0 0
    %668 = vperm.xlu0 %667, %v630
    %v669 = vpop.permute.xlu0 %668
    %672 = vset.pattern.permute.xlu0 0
    %673 = vperm.xlu0 %672, %v631
    %v674 = vpop.permute.xlu0 %673
    %677 = vset.pattern.permute.xlu0 0
    %678 = vperm.xlu0 %677, %v632
    %v679 = vpop.permute.xlu0 %678
    %v681 = vadd.f32 %v653, %v664
    %v682 = vadd.f32 %v654, %v664
    %v683 = vadd.f32 %v655, %v669
    %v684 = vadd.f32 %v656, %v669
    %v685 = vadd.f32 %v657, %v674
    %v686 = vadd.f32 %v658, %v674
    %v687 = vadd.f32 %v659, %v679
    %v688 = vadd.f32 %v660, %v679
    %v689 = vmax.f32 %v681, 0.0
    %v690 = vmax.f32 %v682, 0.0
    %v691 = vmax.f32 %v683, 0.0
    %v692 = vmax.f32 %v684, 0.0
    %v693 = vmax.f32 %v685, 0.0
    %v694 = vmax.f32 %v686, 0.0
    %v695 = vmax.f32 %v687, 0.0
    %v696 = vmax.f32 %v688, 0.0
    %s697 = scalar_lea.vmem %s4, 16
    %v698 = vld [vmem:[%s697] sm:$0xf]
    %v699 = vld [vmem:[%s697 + $0x4] sm:$0xf]
    %v700 = vld [vmem:[%s697 + $0x8] sm:$0xf]
    %v701 = vld [vmem:[%s697 + $0xc] sm:$0xf]
    %s702 = scalar_lea.vmem %s5, 16
    %v703 = vld [vmem:[%s702] sm:$0xf]
    %v704 = vld [vmem:[%s702 + $0x4] sm:$0xf]
    %v705 = vld [vmem:[%s702 + $0x8] sm:$0xf]
    %v706 = vld [vmem:[%s702 + $0xc] sm:$0xf]
    %s707 = scalar_lea.vmem %s6, 16
    %v708 = vld [vmem:[%s707] sm:$0xf]
    %v709 = vld [vmem:[%s707 + $0x4] sm:$0xf]
    %v710 = vld [vmem:[%s707 + $0x8] sm:$0xf]
    %v711 = vld [vmem:[%s707 + $0xc] sm:$0xf]
    %s712 = scalar_lea.vmem %s7, 32
    %v713 = vld [vmem:[%s712] sm:$0xff]
    %v714 = vld [vmem:[%s712 + $0x8] sm:$0xff]
    %v715 = vld [vmem:[%s712 + $0x10] sm:$0xff]
    %v716 = vld [vmem:[%s712 + $0x18] sm:$0xff]
    %v717 = vpack.c.bf16 %v691, %v689
    %v718 = vpack.c.bf16 %v692, %v690
    %v719 = vpack.c.bf16 %v695, %v693
    %v720 = vpack.c.bf16 %v696, %v694
    %v725 = vunpack.c.l.b16 %v698
    %v726 = vunpack.c.l.b16 %v699
    %v727 = vunpack.c.l.b16 %v700
    %v728 = vunpack.c.l.b16 %v701
    %v729 = vpack.c.b16 %v726, %v725
    %v730 = vpack.c.b16 %v728, %v727
    %v732 = vsel %vm268, %v729, 0
    %v735 = vsel %vm268, %v730, 0
    %737 = vmatpush.bf16.msra.mxu0 0
    %738 = vmatpush.bf16.msra.mxu0 0
    %739 = vmatpush.bf16.msra.mxu0 0
    %740 = vmatpush.bf16.msra.mxu0 0
    %741 = vmatpush.bf16.msra.mxu0 0
    %742 = vmatpush.bf16.msra.mxu0 0
    %743 = vmatpush.bf16.msra.mxu0 %v719
    %744 = vmatpush.bf16.msra.mxu0 %v717
    %745 = vmatmul.bf16.gmra.mxu0 %v732
    %v746 = vpop.f32.mrf.mxu0
    %v747 = vadd.f32 0.0, %v746
    %v748 = vpop.f32.mrf.mxu0
    %v749 = vadd.f32 0.0, %v748
    %750 = vmatmul.bf16.gmra.mxu0 %v735
    %v751 = vpop.f32.mrf.mxu0
    %v752 = vadd.f32 0.0, %v751
    %v753 = vpop.f32.mrf.mxu0
    %v754 = vadd.f32 0.0, %v753
    %755 = vdwg.mxu0
    %756 = vmatpush.bf16.msra.mxu0 0
    %757 = vmatpush.bf16.msra.mxu0 0
    %758 = vmatpush.bf16.msra.mxu0 0
    %759 = vmatpush.bf16.msra.mxu0 0
    %760 = vmatpush.bf16.msra.mxu0 0
    %761 = vmatpush.bf16.msra.mxu0 0
    %762 = vmatpush.bf16.msra.mxu0 %v720
    %763 = vmatpush.bf16.msra.mxu0 %v718
    %764 = vmatmul.bf16.gmra.mxu0 %v732
    %v765 = vpop.f32.mrf.mxu0
    %v766 = vadd.f32 0.0, %v765
    %v767 = vpop.f32.mrf.mxu0
    %v768 = vadd.f32 0.0, %v767
    %769 = vmatmul.bf16.gmra.mxu0 %v735
    %v770 = vpop.f32.mrf.mxu0
    %v771 = vadd.f32 0.0, %v770
    %v772 = vpop.f32.mrf.mxu0
    %v773 = vadd.f32 0.0, %v772
    %774 = vdwg.mxu0
    %v779 = vunpack.c.l.b16 %v708
    %v780 = vunpack.c.l.b16 %v709
    %v781 = vunpack.c.l.b16 %v710
    %v782 = vunpack.c.l.b16 %v711
    %v783 = vpack.c.b16 %v780, %v779
    %v784 = vpack.c.b16 %v782, %v781
    %v786 = vsel %vm268, %v783, 0
    %v789 = vsel %vm268, %v784, 0
    %791 = vmatpush.bf16.msra.mxu0 0
    %792 = vmatpush.bf16.msra.mxu0 0
    %793 = vmatpush.bf16.msra.mxu0 0
    %794 = vmatpush.bf16.msra.mxu0 0
    %795 = vmatpush.bf16.msra.mxu0 0
    %796 = vmatpush.bf16.msra.mxu0 0
    %797 = vmatpush.bf16.msra.mxu0 %v719
    %798 = vmatpush.bf16.msra.mxu0 %v717
    %799 = vmatmul.bf16.gmra.mxu0 %v786
    %v800 = vpop.f32.mrf.mxu0
    %v801 = vadd.f32 0.0, %v800
    %v802 = vpop.f32.mrf.mxu0
    %v803 = vadd.f32 0.0, %v802
    %804 = vmatmul.bf16.gmra.mxu0 %v789
    %v805 = vpop.f32.mrf.mxu0
    %v806 = vadd.f32 0.0, %v805
    %v807 = vpop.f32.mrf.mxu0
    %v808 = vadd.f32 0.0, %v807
    %809 = vdwg.mxu0
    %810 = vmatpush.bf16.msra.mxu0 0
    %811 = vmatpush.bf16.msra.mxu0 0
    %812 = vmatpush.bf16.msra.mxu0 0
    %813 = vmatpush.bf16.msra.mxu0 0
    %814 = vmatpush.bf16.msra.mxu0 0
    %815 = vmatpush.bf16.msra.mxu0 0
    %816 = vmatpush.bf16.msra.mxu0 %v720
    %817 = vmatpush.bf16.msra.mxu0 %v718
    %818 = vmatmul.bf16.gmra.mxu0 %v786
    %v819 = vpop.f32.mrf.mxu0
    %v820 = vadd.f32 0.0, %v819
    %v821 = vpop.f32.mrf.mxu0
    %v822 = vadd.f32 0.0, %v821
    %823 = vmatmul.bf16.gmra.mxu0 %v789
    %v824 = vpop.f32.mrf.mxu0
    %v825 = vadd.f32 0.0, %v824
    %v826 = vpop.f32.mrf.mxu0
    %v827 = vadd.f32 0.0, %v826
    %828 = vdwg.mxu0
    %829 = vrot.lane.b32.xlu0 %v747, 1
    %v830 = vpop.permute.xlu0 %829
    %831 = vrot.lane.b32.xlu0 %v749, 1
    %v832 = vpop.permute.xlu0 %831
    %833 = vrot.lane.b32.xlu0 %v752, 1
    %v834 = vpop.permute.xlu0 %833
    %835 = vrot.lane.b32.xlu0 %v754, 1
    %v836 = vpop.permute.xlu0 %835
    %837 = vrot.lane.b32.xlu0 %v766, 1
    %v838 = vpop.permute.xlu0 %837
    %839 = vrot.lane.b32.xlu0 %v768, 1
    %v840 = vpop.permute.xlu0 %839
    %841 = vrot.lane.b32.xlu0 %v771, 1
    %v842 = vpop.permute.xlu0 %841
    %843 = vrot.lane.b32.xlu0 %v773, 1
    %v844 = vpop.permute.xlu0 %843
    %v845 = vsel %vm92, %v830, %v838
    %v846 = vsel %vm92, %v832, %v840
    %v847 = vsel %vm92, %v834, %v842
    %v848 = vsel %vm92, %v836, %v844
    %v849 = vsel %vm92, %v838, %v830
    %v850 = vsel %vm92, %v840, %v832
    %v851 = vsel %vm92, %v842, %v834
    %v852 = vsel %vm92, %v844, %v836
    %v853 = vmul.f32 %v76, %v849
    %v854 = vmul.f32 %v77, %v845
    %v855 = vmul.f32 %v76, %v850
    %v856 = vmul.f32 %v77, %v846
    %v857 = vmul.f32 %v76, %v851
    %v858 = vmul.f32 %v77, %v847
    %v859 = vmul.f32 %v76, %v852
    %v860 = vmul.f32 %v77, %v848
    %v865 = vunpack.c.l.b16 %v703
    %v866 = vunpack.c.l.b16 %v704
    %v867 = vunpack.c.l.b16 %v705
    %v868 = vunpack.c.l.b16 %v706
    %v869 = vpack.c.b16 %v866, %v865
    %v870 = vpack.c.b16 %v868, %v867
    %v872 = vsel %vm268, %v869, 0
    %v875 = vsel %vm268, %v870, 0
    %877 = vmatpush.bf16.msra.mxu0 0
    %878 = vmatpush.bf16.msra.mxu0 0
    %879 = vmatpush.bf16.msra.mxu0 0
    %880 = vmatpush.bf16.msra.mxu0 0
    %881 = vmatpush.bf16.msra.mxu0 0
    %882 = vmatpush.bf16.msra.mxu0 0
    %883 = vmatpush.bf16.msra.mxu0 %v719
    %884 = vmatpush.bf16.msra.mxu0 %v717
    %885 = vmatmul.bf16.gmra.mxu0 %v872
    %v886 = vpop.f32.mrf.mxu0
    %v887 = vadd.f32 %v853, %v886
    %v888 = vpop.f32.mrf.mxu0
    %v889 = vadd.f32 %v855, %v888
    %890 = vmatmul.bf16.gmra.mxu0 %v875
    %v891 = vpop.f32.mrf.mxu0
    %v892 = vadd.f32 %v857, %v891
    %v893 = vpop.f32.mrf.mxu0
    %v894 = vadd.f32 %v859, %v893
    %895 = vdwg.mxu0
    %896 = vmatpush.bf16.msra.mxu0 0
    %897 = vmatpush.bf16.msra.mxu0 0
    %898 = vmatpush.bf16.msra.mxu0 0
    %899 = vmatpush.bf16.msra.mxu0 0
    %900 = vmatpush.bf16.msra.mxu0 0
    %901 = vmatpush.bf16.msra.mxu0 0
    %902 = vmatpush.bf16.msra.mxu0 %v720
    %903 = vmatpush.bf16.msra.mxu0 %v718
    %904 = vmatmul.bf16.gmra.mxu0 %v872
    %v905 = vpop.f32.mrf.mxu0
    %v906 = vadd.f32 %v854, %v905
    %v907 = vpop.f32.mrf.mxu0
    %v908 = vadd.f32 %v856, %v907
    %909 = vmatmul.bf16.gmra.mxu0 %v875
    %v910 = vpop.f32.mrf.mxu0
    %v911 = vadd.f32 %v858, %v910
    %v912 = vpop.f32.mrf.mxu0
    %v913 = vadd.f32 %v860, %v912
    %914 = vdwg.mxu0
    %915 = vrot.lane.b32.xlu0 %v801, 127
    %v916 = vpop.permute.xlu0 %915
    %917 = vrot.lane.b32.xlu0 %v803, 127
    %v918 = vpop.permute.xlu0 %917
    %919 = vrot.lane.b32.xlu0 %v806, 127
    %v920 = vpop.permute.xlu0 %919
    %921 = vrot.lane.b32.xlu0 %v808, 127
    %v922 = vpop.permute.xlu0 %921
    %923 = vrot.lane.b32.xlu0 %v820, 127
    %v924 = vpop.permute.xlu0 %923
    %925 = vrot.lane.b32.xlu0 %v822, 127
    %v926 = vpop.permute.xlu0 %925
    %927 = vrot.lane.b32.xlu0 %v825, 127
    %v928 = vpop.permute.xlu0 %927
    %929 = vrot.lane.b32.xlu0 %v827, 127
    %v930 = vpop.permute.xlu0 %929
    %v931 = vsel %vm101, %v916, %v924
    %v932 = vsel %vm101, %v918, %v926
    %v933 = vsel %vm101, %v920, %v928
    %v934 = vsel %vm101, %v922, %v930
    %v935 = vsel %vm101, %v924, %v916
    %v936 = vsel %vm101, %v926, %v918
    %v937 = vsel %vm101, %v928, %v920
    %v938 = vsel %vm101, %v930, %v922
    %v939 = vmul.f32 %v80, %v931
    %v940 = vmul.f32 %v81, %v935
    %v941 = vmul.f32 %v80, %v932
    %v942 = vmul.f32 %v81, %v936
    %v943 = vmul.f32 %v80, %v933
    %v944 = vmul.f32 %v81, %v937
    %v945 = vmul.f32 %v80, %v934
    %v946 = vmul.f32 %v81, %v938
    %v947 = vadd.f32 %v887, %v939
    %v948 = vadd.f32 %v906, %v940
    %v949 = vadd.f32 %v889, %v941
    %v950 = vadd.f32 %v908, %v942
    %v951 = vadd.f32 %v892, %v943
    %v952 = vadd.f32 %v911, %v944
    %v953 = vadd.f32 %v894, %v945
    %v954 = vadd.f32 %v913, %v946
    %956 = vset.pattern.permute.xlu0 0
    %957 = vperm.xlu0 %956, %v713
    %v958 = vpop.permute.xlu0 %957
    %961 = vset.pattern.permute.xlu0 0
    %962 = vperm.xlu0 %961, %v714
    %v963 = vpop.permute.xlu0 %962
    %966 = vset.pattern.permute.xlu0 0
    %967 = vperm.xlu0 %966, %v715
    %v968 = vpop.permute.xlu0 %967
    %971 = vset.pattern.permute.xlu0 0
    %972 = vperm.xlu0 %971, %v716
    %v973 = vpop.permute.xlu0 %972
    %v975 = vadd.f32 %v947, %v958
    %v976 = vadd.f32 %v948, %v958
    %v977 = vadd.f32 %v949, %v963
    %v978 = vadd.f32 %v950, %v963
    %v979 = vadd.f32 %v951, %v968
    %v980 = vadd.f32 %v952, %v968
    %v981 = vadd.f32 %v953, %v973
    %v982 = vadd.f32 %v954, %v973
    %v983 = vadd.f32 %v975, %v976
    %984 = vadd.xlane.f32.xlu0 %v983
    %v985 = vpop.xlane.xlu0 %984
    %v986 = vadd.f32 %v977, %v978
    %987 = vadd.xlane.f32.xlu0 %v986
    %v988 = vpop.xlane.xlu0 %987
    %v989 = vadd.f32 %v979, %v980
    %990 = vadd.xlane.f32.xlu0 %v989
    %v991 = vpop.xlane.xlu0 %990
    %v992 = vadd.f32 %v981, %v982
    %993 = vadd.xlane.f32.xlu0 %v992
    %v994 = vpop.xlane.xlu0 %993
    %v995 = vmul.f32 %v975, %v975
    %v996 = vmul.f32 %v976, %v976
    %v997 = vmul.f32 %v977, %v977
    %v998 = vmul.f32 %v978, %v978
    %v999 = vmul.f32 %v979, %v979
    %v1000 = vmul.f32 %v980, %v980
    %v1001 = vmul.f32 %v981, %v981
    %v1002 = vmul.f32 %v982, %v982
    %v1003 = vadd.f32 %v995, %v996
    %1004 = vadd.xlane.f32.xlu0 %v1003
    %v1005 = vpop.xlane.xlu0 %1004
    %v1006 = vadd.f32 %v997, %v998
    %1007 = vadd.xlane.f32.xlu0 %v1006
    %v1008 = vpop.xlane.xlu0 %1007
    %v1009 = vadd.f32 %v999, %v1000
    %1010 = vadd.xlane.f32.xlu0 %v1009
    %v1011 = vpop.xlane.xlu0 %1010
    %v1012 = vadd.f32 %v1001, %v1002
    %1013 = vadd.xlane.f32.xlu0 %v1012
    %v1014 = vpop.xlane.xlu0 %1013
    %v1015 = vmul.f32 %v985, 0.00390625
    %v1016 = vmul.f32 %v988, 0.00390625
    %v1017 = vmul.f32 %v991, 0.00390625
    %v1018 = vmul.f32 %v994, 0.00390625
    %v1019 = vmul.f32 %v1005, 0.00390625
    %v1020 = vmul.f32 %v1008, 0.00390625
    %v1021 = vmul.f32 %v1011, 0.00390625
    %v1022 = vmul.f32 %v1014, 0.00390625
    %v1023 = vmul.f32 %v1015, %v1015
    %v1024 = vmul.f32 %v1016, %v1016
    %v1025 = vmul.f32 %v1017, %v1017
    %v1026 = vmul.f32 %v1018, %v1018
    %v1027 = vsub.f32 %v1019, %v1023
    %v1028 = vsub.f32 %v1020, %v1024
    %v1029 = vsub.f32 %v1021, %v1025
    %v1030 = vsub.f32 %v1022, %v1026
    %v1031 = vadd.f32 %v1027, 1e-05
    %v1032 = vadd.f32 %v1028, 1e-05
    %v1033 = vadd.f32 %v1029, 1e-05
    %v1034 = vadd.f32 %v1030, 1e-05
    %v1035 = vrsqrt.pop %v1031
    %v1036 = vmul.f32 %v1035, %v1031
    %v1037 = vmul.f32 %v1036, %v1035
    %v1038 = vmul.f32 0.5, %v1037
    %v1039 = vsub.f32 1.5, %v1038
    %v1040 = vmul.f32 %v1035, %v1039
    %vm1041 = vweird.f32 %v1031
    %vm1042 = vweird.f32 %v1035
    %vm1043 = vmor %vm1041, %vm1042
    %v1044 = vsel %vm1043, %v1035, %v1040
    %v1045 = vrsqrt.pop %v1032
    %v1046 = vmul.f32 %v1045, %v1032
    %v1047 = vmul.f32 %v1046, %v1045
    %v1048 = vmul.f32 0.5, %v1047
    %v1049 = vsub.f32 1.5, %v1048
    %v1050 = vmul.f32 %v1045, %v1049
    %vm1051 = vweird.f32 %v1032
    %vm1052 = vweird.f32 %v1045
    %vm1053 = vmor %vm1051, %vm1052
    %v1054 = vsel %vm1053, %v1045, %v1050
    %v1055 = vrsqrt.pop %v1033
    %v1056 = vmul.f32 %v1055, %v1033
    %v1057 = vmul.f32 %v1056, %v1055
    %v1058 = vmul.f32 0.5, %v1057
    %v1059 = vsub.f32 1.5, %v1058
    %v1060 = vmul.f32 %v1055, %v1059
    %vm1061 = vweird.f32 %v1033
    %vm1062 = vweird.f32 %v1055
    %vm1063 = vmor %vm1061, %vm1062
    %v1064 = vsel %vm1063, %v1055, %v1060
    %v1065 = vrsqrt.pop %v1034
    %v1066 = vmul.f32 %v1065, %v1034
    %v1067 = vmul.f32 %v1066, %v1065
    %v1068 = vmul.f32 0.5, %v1067
    %v1069 = vsub.f32 1.5, %v1068
    %v1070 = vmul.f32 %v1065, %v1069
    %vm1071 = vweird.f32 %v1034
    %vm1072 = vweird.f32 %v1065
    %vm1073 = vmor %vm1071, %vm1072
    %v1074 = vsel %vm1073, %v1065, %v1070
    %s1075 = scalar_lea.vmem %s8, 32
    %v1076 = vld [vmem:[%s1075] sm:$0xff]
    %v1077 = vld [vmem:[%s1075 + $0x8] sm:$0xff]
    %v1078 = vld [vmem:[%s1075 + $0x10] sm:$0xff]
    %v1079 = vld [vmem:[%s1075 + $0x18] sm:$0xff]
    %v1080 = vmul.f32 %v1044, %v1076
    %v1081 = vmul.f32 %v1054, %v1077
    %v1082 = vmul.f32 %v1064, %v1078
    %v1083 = vmul.f32 %v1074, %v1079
    %s1084 = scalar_lea.vmem %s9, 32
    %v1085 = vld [vmem:[%s1084] sm:$0xff]
    %v1086 = vld [vmem:[%s1084 + $0x8] sm:$0xff]
    %v1087 = vld [vmem:[%s1084 + $0x10] sm:$0xff]
    %v1088 = vld [vmem:[%s1084 + $0x18] sm:$0xff]
    %v1089 = vmul.f32 %v1015, %v1080
    %v1090 = vmul.f32 %v1016, %v1081
    %v1091 = vmul.f32 %v1017, %v1082
    %v1092 = vmul.f32 %v1018, %v1083
    %v1093 = vsub.f32 %v1085, %v1089
    %v1094 = vsub.f32 %v1086, %v1090
    %v1095 = vsub.f32 %v1087, %v1091
    %v1096 = vsub.f32 %v1088, %v1092
    %1098 = vset.pattern.permute.xlu0 0
    %1099 = vperm.xlu0 %1098, %v1080
    %v1100 = vpop.permute.xlu0 %1099
    %1103 = vset.pattern.permute.xlu0 0
    %1104 = vperm.xlu0 %1103, %v1081
    %v1105 = vpop.permute.xlu0 %1104
    %1108 = vset.pattern.permute.xlu0 0
    %1109 = vperm.xlu0 %1108, %v1082
    %v1110 = vpop.permute.xlu0 %1109
    %1113 = vset.pattern.permute.xlu0 0
    %1114 = vperm.xlu0 %1113, %v1083
    %v1115 = vpop.permute.xlu0 %1114
    %v1117 = vmul.f32 %v975, %v1100
    %v1118 = vmul.f32 %v976, %v1100
    %v1119 = vmul.f32 %v977, %v1105
    %v1120 = vmul.f32 %v978, %v1105
    %v1121 = vmul.f32 %v979, %v1110
    %v1122 = vmul.f32 %v980, %v1110
    %v1123 = vmul.f32 %v981, %v1115
    %v1124 = vmul.f32 %v982, %v1115
    %1126 = vset.pattern.permute.xlu0 0
    %1127 = vperm.xlu0 %1126, %v1093
    %v1128 = vpop.permute.xlu0 %1127
    %1131 = vset.pattern.permute.xlu0 0
    %1132 = vperm.xlu0 %1131, %v1094
    %v1133 = vpop.permute.xlu0 %1132
    %1136 = vset.pattern.permute.xlu0 0
    %1137 = vperm.xlu0 %1136, %v1095
    %v1138 = vpop.permute.xlu0 %1137
    %1141 = vset.pattern.permute.xlu0 0
    %1142 = vperm.xlu0 %1141, %v1096
    %v1143 = vpop.permute.xlu0 %1142
    %v1145 = vadd.f32 %v1117, %v1128
    %v1146 = vadd.f32 %v1118, %v1128
    %v1147 = vadd.f32 %v1119, %v1133
    %v1148 = vadd.f32 %v1120, %v1133
    %v1149 = vadd.f32 %v1121, %v1138
    %v1150 = vadd.f32 %v1122, %v1138
    %v1151 = vadd.f32 %v1123, %v1143
    %v1152 = vadd.f32 %v1124, %v1143
    %v1153 = vmax.f32 %v1145, 0.0
    %v1154 = vmax.f32 %v1146, 0.0
    %v1155 = vmax.f32 %v1147, 0.0
    %v1156 = vmax.f32 %v1148, 0.0
    %v1157 = vmax.f32 %v1149, 0.0
    %v1158 = vmax.f32 %v1150, 0.0
    %v1159 = vmax.f32 %v1151, 0.0
    %v1160 = vmax.f32 %v1152, 0.0
    %v1161 = vld [vmem:[%s10] sm:$0xf]
    %v1162 = vld [vmem:[%s10 + $0x4] sm:$0xf]
    %v1163 = vld [vmem:[%s10 + $0x8] sm:$0xf]
    %v1164 = vld [vmem:[%s10 + $0xc] sm:$0xf]
    %v1165 = vld [vmem:[%s11] sm:$0xf]
    %v1166 = vld [vmem:[%s11 + $0x4] sm:$0xf]
    %v1167 = vld [vmem:[%s11 + $0x8] sm:$0xf]
    %v1168 = vld [vmem:[%s11 + $0xc] sm:$0xf]
    %v1169 = vld [vmem:[%s12] sm:$0xf]
    %v1170 = vld [vmem:[%s12 + $0x4] sm:$0xf]
    %v1171 = vld [vmem:[%s12 + $0x8] sm:$0xf]
    %v1172 = vld [vmem:[%s12 + $0xc] sm:$0xf]
    %v1173 = vld [vmem:[%s13] sm:$0xff]
    %v1174 = vld [vmem:[%s13 + $0x8] sm:$0xff]
    %v1175 = vld [vmem:[%s13 + $0x10] sm:$0xff]
    %v1176 = vld [vmem:[%s13 + $0x18] sm:$0xff]
    %v1177 = vpack.c.bf16 %v1155, %v1153
    %v1178 = vpack.c.bf16 %v1156, %v1154
    %v1179 = vpack.c.bf16 %v1159, %v1157
    %v1180 = vpack.c.bf16 %v1160, %v1158
    %v1185 = vunpack.c.l.b16 %v1161
    %v1186 = vunpack.c.l.b16 %v1162
    %v1187 = vunpack.c.l.b16 %v1163
    %v1188 = vunpack.c.l.b16 %v1164
    %v1189 = vpack.c.b16 %v1186, %v1185
    %v1190 = vpack.c.b16 %v1188, %v1187
    %v1192 = vsel %vm268, %v1189, 0
    %v1195 = vsel %vm268, %v1190, 0
    %1197 = vmatpush.bf16.msra.mxu0 0
    %1198 = vmatpush.bf16.msra.mxu0 0
    %1199 = vmatpush.bf16.msra.mxu0 0
    %1200 = vmatpush.bf16.msra.mxu0 0
    %1201 = vmatpush.bf16.msra.mxu0 0
    %1202 = vmatpush.bf16.msra.mxu0 0
    %1203 = vmatpush.bf16.msra.mxu0 %v1179
    %1204 = vmatpush.bf16.msra.mxu0 %v1177
    %1205 = vmatmul.bf16.gmra.mxu0 %v1192
    %v1206 = vpop.f32.mrf.mxu0
    %v1207 = vadd.f32 0.0, %v1206
    %v1208 = vpop.f32.mrf.mxu0
    %v1209 = vadd.f32 0.0, %v1208
    %1210 = vmatmul.bf16.gmra.mxu0 %v1195
    %v1211 = vpop.f32.mrf.mxu0
    %v1212 = vadd.f32 0.0, %v1211
    %v1213 = vpop.f32.mrf.mxu0
    %v1214 = vadd.f32 0.0, %v1213
    %1215 = vdwg.mxu0
    %1216 = vmatpush.bf16.msra.mxu0 0
    %1217 = vmatpush.bf16.msra.mxu0 0
    %1218 = vmatpush.bf16.msra.mxu0 0
    %1219 = vmatpush.bf16.msra.mxu0 0
    %1220 = vmatpush.bf16.msra.mxu0 0
    %1221 = vmatpush.bf16.msra.mxu0 0
    %1222 = vmatpush.bf16.msra.mxu0 %v1180
    %1223 = vmatpush.bf16.msra.mxu0 %v1178
    %1224 = vmatmul.bf16.gmra.mxu0 %v1192
    %v1225 = vpop.f32.mrf.mxu0
    %v1226 = vadd.f32 0.0, %v1225
    %v1227 = vpop.f32.mrf.mxu0
    %v1228 = vadd.f32 0.0, %v1227
    %1229 = vmatmul.bf16.gmra.mxu0 %v1195
    %v1230 = vpop.f32.mrf.mxu0
    %v1231 = vadd.f32 0.0, %v1230
    %v1232 = vpop.f32.mrf.mxu0
    %v1233 = vadd.f32 0.0, %v1232
    %1234 = vdwg.mxu0
    %v1239 = vunpack.c.l.b16 %v1169
    %v1240 = vunpack.c.l.b16 %v1170
    %v1241 = vunpack.c.l.b16 %v1171
    %v1242 = vunpack.c.l.b16 %v1172
    %v1243 = vpack.c.b16 %v1240, %v1239
    %v1244 = vpack.c.b16 %v1242, %v1241
    %v1246 = vsel %vm268, %v1243, 0
    %v1249 = vsel %vm268, %v1244, 0
    %1251 = vmatpush.bf16.msra.mxu0 0
    %1252 = vmatpush.bf16.msra.mxu0 0
    %1253 = vmatpush.bf16.msra.mxu0 0
    %1254 = vmatpush.bf16.msra.mxu0 0
    %1255 = vmatpush.bf16.msra.mxu0 0
    %1256 = vmatpush.bf16.msra.mxu0 0
    %1257 = vmatpush.bf16.msra.mxu0 %v1179
    %1258 = vmatpush.bf16.msra.mxu0 %v1177
    %1259 = vmatmul.bf16.gmra.mxu0 %v1246
    %v1260 = vpop.f32.mrf.mxu0
    %v1261 = vadd.f32 0.0, %v1260
    %v1262 = vpop.f32.mrf.mxu0
    %v1263 = vadd.f32 0.0, %v1262
    %1264 = vmatmul.bf16.gmra.mxu0 %v1249
    %v1265 = vpop.f32.mrf.mxu0
    %v1266 = vadd.f32 0.0, %v1265
    %v1267 = vpop.f32.mrf.mxu0
    %v1268 = vadd.f32 0.0, %v1267
    %1269 = vdwg.mxu0
    %1270 = vmatpush.bf16.msra.mxu0 0
    %1271 = vmatpush.bf16.msra.mxu0 0
    %1272 = vmatpush.bf16.msra.mxu0 0
    %1273 = vmatpush.bf16.msra.mxu0 0
    %1274 = vmatpush.bf16.msra.mxu0 0
    %1275 = vmatpush.bf16.msra.mxu0 0
    %1276 = vmatpush.bf16.msra.mxu0 %v1180
    %1277 = vmatpush.bf16.msra.mxu0 %v1178
    %1278 = vmatmul.bf16.gmra.mxu0 %v1246
    %v1279 = vpop.f32.mrf.mxu0
    %v1280 = vadd.f32 0.0, %v1279
    %v1281 = vpop.f32.mrf.mxu0
    %v1282 = vadd.f32 0.0, %v1281
    %1283 = vmatmul.bf16.gmra.mxu0 %v1249
    %v1284 = vpop.f32.mrf.mxu0
    %v1285 = vadd.f32 0.0, %v1284
    %v1286 = vpop.f32.mrf.mxu0
    %v1287 = vadd.f32 0.0, %v1286
    %1288 = vdwg.mxu0
    %1289 = vrot.lane.b32.xlu0 %v1207, 1
    %v1290 = vpop.permute.xlu0 %1289
    %1291 = vrot.lane.b32.xlu0 %v1209, 1
    %v1292 = vpop.permute.xlu0 %1291
    %1293 = vrot.lane.b32.xlu0 %v1212, 1
    %v1294 = vpop.permute.xlu0 %1293
    %1295 = vrot.lane.b32.xlu0 %v1214, 1
    %v1296 = vpop.permute.xlu0 %1295
    %1297 = vrot.lane.b32.xlu0 %v1226, 1
    %v1298 = vpop.permute.xlu0 %1297
    %1299 = vrot.lane.b32.xlu0 %v1228, 1
    %v1300 = vpop.permute.xlu0 %1299
    %1301 = vrot.lane.b32.xlu0 %v1231, 1
    %v1302 = vpop.permute.xlu0 %1301
    %1303 = vrot.lane.b32.xlu0 %v1233, 1
    %v1304 = vpop.permute.xlu0 %1303
    %v1305 = vsel %vm92, %v1290, %v1298
    %v1306 = vsel %vm92, %v1292, %v1300
    %v1307 = vsel %vm92, %v1294, %v1302
    %v1308 = vsel %vm92, %v1296, %v1304
    %v1309 = vsel %vm92, %v1298, %v1290
    %v1310 = vsel %vm92, %v1300, %v1292
    %v1311 = vsel %vm92, %v1302, %v1294
    %v1312 = vsel %vm92, %v1304, %v1296
    %v1313 = vmul.f32 %v76, %v1309
    %v1314 = vmul.f32 %v77, %v1305
    %v1315 = vmul.f32 %v76, %v1310
    %v1316 = vmul.f32 %v77, %v1306
    %v1317 = vmul.f32 %v76, %v1311
    %v1318 = vmul.f32 %v77, %v1307
    %v1319 = vmul.f32 %v76, %v1312
    %v1320 = vmul.f32 %v77, %v1308
    %v1325 = vunpack.c.l.b16 %v1165
    %v1326 = vunpack.c.l.b16 %v1166
    %v1327 = vunpack.c.l.b16 %v1167
    %v1328 = vunpack.c.l.b16 %v1168
    %v1329 = vpack.c.b16 %v1326, %v1325
    %v1330 = vpack.c.b16 %v1328, %v1327
    %v1332 = vsel %vm268, %v1329, 0
    %v1335 = vsel %vm268, %v1330, 0
    %1337 = vmatpush.bf16.msra.mxu0 0
    %1338 = vmatpush.bf16.msra.mxu0 0
    %1339 = vmatpush.bf16.msra.mxu0 0
    %1340 = vmatpush.bf16.msra.mxu0 0
    %1341 = vmatpush.bf16.msra.mxu0 0
    %1342 = vmatpush.bf16.msra.mxu0 0
    %1343 = vmatpush.bf16.msra.mxu0 %v1179
    %1344 = vmatpush.bf16.msra.mxu0 %v1177
    %1345 = vmatmul.bf16.gmra.mxu0 %v1332
    %v1346 = vpop.f32.mrf.mxu0
    %v1347 = vadd.f32 %v1313, %v1346
    %v1348 = vpop.f32.mrf.mxu0
    %v1349 = vadd.f32 %v1315, %v1348
    %1350 = vmatmul.bf16.gmra.mxu0 %v1335
    %v1351 = vpop.f32.mrf.mxu0
    %v1352 = vadd.f32 %v1317, %v1351
    %v1353 = vpop.f32.mrf.mxu0
    %v1354 = vadd.f32 %v1319, %v1353
    %1355 = vdwg.mxu0
    %1356 = vmatpush.bf16.msra.mxu0 0
    %1357 = vmatpush.bf16.msra.mxu0 0
    %1358 = vmatpush.bf16.msra.mxu0 0
    %1359 = vmatpush.bf16.msra.mxu0 0
    %1360 = vmatpush.bf16.msra.mxu0 0
    %1361 = vmatpush.bf16.msra.mxu0 0
    %1362 = vmatpush.bf16.msra.mxu0 %v1180
    %1363 = vmatpush.bf16.msra.mxu0 %v1178
    %1364 = vmatmul.bf16.gmra.mxu0 %v1332
    %v1365 = vpop.f32.mrf.mxu0
    %v1366 = vadd.f32 %v1314, %v1365
    %v1367 = vpop.f32.mrf.mxu0
    %v1368 = vadd.f32 %v1316, %v1367
    %1369 = vmatmul.bf16.gmra.mxu0 %v1335
    %v1370 = vpop.f32.mrf.mxu0
    %v1371 = vadd.f32 %v1318, %v1370
    %v1372 = vpop.f32.mrf.mxu0
    %v1373 = vadd.f32 %v1320, %v1372
    %1374 = vdwg.mxu0
    %1375 = vrot.lane.b32.xlu0 %v1261, 127
    %v1376 = vpop.permute.xlu0 %1375
    %1377 = vrot.lane.b32.xlu0 %v1263, 127
    %v1378 = vpop.permute.xlu0 %1377
    %1379 = vrot.lane.b32.xlu0 %v1266, 127
    %v1380 = vpop.permute.xlu0 %1379
    %1381 = vrot.lane.b32.xlu0 %v1268, 127
    %v1382 = vpop.permute.xlu0 %1381
    %1383 = vrot.lane.b32.xlu0 %v1280, 127
    %v1384 = vpop.permute.xlu0 %1383
    %1385 = vrot.lane.b32.xlu0 %v1282, 127
    %v1386 = vpop.permute.xlu0 %1385
    %1387 = vrot.lane.b32.xlu0 %v1285, 127
    %v1388 = vpop.permute.xlu0 %1387
    %1389 = vrot.lane.b32.xlu0 %v1287, 127
    %v1390 = vpop.permute.xlu0 %1389
    %v1391 = vsel %vm101, %v1376, %v1384
    %v1392 = vsel %vm101, %v1378, %v1386
    %v1393 = vsel %vm101, %v1380, %v1388
    %v1394 = vsel %vm101, %v1382, %v1390
    %v1395 = vsel %vm101, %v1384, %v1376
    %v1396 = vsel %vm101, %v1386, %v1378
    %v1397 = vsel %vm101, %v1388, %v1380
    %v1398 = vsel %vm101, %v1390, %v1382
    %v1399 = vmul.f32 %v80, %v1391
    %v1400 = vmul.f32 %v81, %v1395
    %v1401 = vmul.f32 %v80, %v1392
    %v1402 = vmul.f32 %v81, %v1396
    %v1403 = vmul.f32 %v80, %v1393
    %v1404 = vmul.f32 %v81, %v1397
    %v1405 = vmul.f32 %v80, %v1394
    %v1406 = vmul.f32 %v81, %v1398
    %v1407 = vadd.f32 %v1347, %v1399
    %v1408 = vadd.f32 %v1366, %v1400
    %v1409 = vadd.f32 %v1349, %v1401
    %v1410 = vadd.f32 %v1368, %v1402
    %v1411 = vadd.f32 %v1352, %v1403
    %v1412 = vadd.f32 %v1371, %v1404
    %v1413 = vadd.f32 %v1354, %v1405
    %v1414 = vadd.f32 %v1373, %v1406
    %1416 = vset.pattern.permute.xlu0 0
    %1417 = vperm.xlu0 %1416, %v1173
    %v1418 = vpop.permute.xlu0 %1417
    %1421 = vset.pattern.permute.xlu0 0
    %1422 = vperm.xlu0 %1421, %v1174
    %v1423 = vpop.permute.xlu0 %1422
    %1426 = vset.pattern.permute.xlu0 0
    %1427 = vperm.xlu0 %1426, %v1175
    %v1428 = vpop.permute.xlu0 %1427
    %1431 = vset.pattern.permute.xlu0 0
    %1432 = vperm.xlu0 %1431, %v1176
    %v1433 = vpop.permute.xlu0 %1432
    %v1435 = vadd.f32 %v1407, %v1418
    %v1436 = vadd.f32 %v1408, %v1418
    %v1437 = vadd.f32 %v1409, %v1423
    %v1438 = vadd.f32 %v1410, %v1423
    %v1439 = vadd.f32 %v1411, %v1428
    %v1440 = vadd.f32 %v1412, %v1428
    %v1441 = vadd.f32 %v1413, %v1433
    %v1442 = vadd.f32 %v1414, %v1433
    %v1443 = vld [vmem:[%s0] sm:$0x3]
    %v1444 = vlaneseq
    %v1445 = vshrl.u32 %v1444, 7
    %v1446 = vadd.s32 %v1445, 8
    %v1447 = vcvt.s32.f32 %v1445
    %v1448 = vcvt.s32.f32 %v1446
    %vm1449 = vcmp.ge.f32.partialorder %v1447, 6.0
    %vm1450 = vcmp.ge.f32.partialorder %v1448, 6.0
    %v1451 = vsel %vm1449, 1.0, 0.0
    %v1452 = vsel %vm1450, 1.0, 0.0
    %v1453 = vmul.f32 %v1451, 6.0
    %v1454 = vmul.f32 %v1452, 6.0
    %v1455 = vsub.f32 %v1447, %v1453
    %v1456 = vsub.f32 %v1448, %v1454
    %v1457 = vmul.f32 %v1455, 0.6931472
    %v1458 = vmul.f32 %v1456, 0.6931472
    %v1459 = vmul.f32 %v1457, 1.442695
    %v1460 = vpow.pop %v1459
    %v1461 = vmul.f32 %v1458, 1.442695
    %v1462 = vpow.pop %v1461
    %v1463 = vmul.f32 %v1451, 1.5707964
    %v1464 = vmul.f32 %v1452, 1.5707964
    %v1466 = vperm.slane %v1443, 0
    %v1467 = vperm.slane %v1443, 1
    %v1470 = vmul.f32 %v1460, %v1466
    %v1471 = vmul.f32 %v1460, %v1467
    %v1472 = vmul.f32 %v1462, %v1466
    %v1473 = vmul.f32 %v1462, %v1467
    %v1474 = vadd.f32 %v1470, %v1463
    %v1475 = vadd.f32 %v1471, %v1463
    %v1476 = vadd.f32 %v1472, %v1464
    %v1477 = vadd.f32 %v1473, %v1464
    %v1478 = vand.u32 2147483647, %v1474
    %vm1479 = vcmp.le.f32.partialorder %v1478, 0.7853982
    %vm1480 = vcmp.lt.s32.totalorder %v1474, 0
    %v1481 = vand.u32 %v1474, 2139095040
    %v1482 = vshrl.u32 %v1481, 23
    %v1483 = vsub.s32 %v1482, 127
    %v1484 = vand.u32 2147483647, %v1474
    %v1485 = vand.u32 %v1484, 8388607
    %v1486 = vor.u32 %v1485, 8388608
    %v1487 = vsub.s32 0, %v1486
    %v1488 = vadd.s32 %v1483, 1
    %vm1489 = vcmp.gt.s32.totalorder %v1488, 0
    %v1490 = vsel %vm1489, %v1488, 0
    %v1491 = vshrl.u32 %v1490, 5
    %v1492 = vand.u32 %v1490, 31
    %v1493 = vsub.s32 32, %v1492
    %v1494 = vshrl.u32 683565275, %v1493
    %v1495 = vshll.u32 683565275, %v1492
    %v1496 = vshrl.u32 2475754826, %v1493
    %v1497 = vor.u32 %v1495, %v1496
    %v1498 = vshll.u32 2475754826, %v1492
    %v1499 = vshrl.u32 2131351028, %v1493
    %v1500 = vor.u32 %v1498, %v1499
    %v1501 = vshll.u32 2131351028, %v1492
    %v1502 = vshrl.u32 2102212464, %v1493
    %v1503 = vor.u32 %v1501, %v1502
    %v1504 = vshll.u32 2102212464, %v1492
    %v1505 = vshrl.u32 920167782, %v1493
    %v1506 = vor.u32 %v1504, %v1505
    %v1507 = vshll.u32 920167782, %v1492
    %v1508 = vshrl.u32 1326507024, %v1493
    %v1509 = vor.u32 %v1507, %v1508
    %vm1510 = vcmp.lt.s32.totalorder %v1491, 1
    %vm1511 = vcmp.lt.s32.totalorder %v1491, 2
    %vm1512 = vcmp.lt.s32.totalorder %v1491, 3
    %vm1513 = vcmp.lt.s32.totalorder %v1491, 4
    %v1514 = vsel %vm1510, %v1494, %v1497
    %v1515 = vsel %vm1513, %v1503, 2102212464
    %v1516 = vsel %vm1512, %v1500, %v1515
    %v1517 = vsel %vm1511, %v1514, %v1516
    %v1518 = vsel %vm1510, %v1497, %v1500
    %v1519 = vsel %vm1513, %v1506, 920167782
    %v1520 = vsel %vm1512, %v1503, %v1519
    %v1521 = vsel %vm1511, %v1518, %v1520
    %v1522 = vsel %vm1510, %v1500, %v1503
    %v1523 = vsel %vm1513, %v1509, 1326507024
    %v1524 = vsel %vm1512, %v1506, %v1523
    %v1525 = vsel %vm1511, %v1522, %v1524
    %v1526 = vshll.u32 %v1486, 8
    %v1527 = vand.u32 %v1526, 65535
    %v1528 = vshrl.u32 %v1526, 16
    %v1529 = vand.u32 %v1525, 65535
    %v1530 = vshrl.u32 %v1525, 16
    %v1531 = vmul.u32 %v1527, %v1529
    %v1532 = vmul.u32 %v1527, %v1530
    %v1533 = vmul.u32 %v1528, %v1529
    %v1534 = vmul.u32 %v1528, %v1530
    %v1535 = vshll.u32 %v1532, 16
    %v1536 = vshrl.u32 %v1532, 16
    %v1537 = vshll.u32 %v1533, 16
    %v1538 = vshrl.u32 %v1533, 16
    %vm1539 = vc.u32 %v1531, %v1535
    %v1540 = vsel %vm1539, 1, 0
    %v1541 = vadd.s32 %v1531, %v1535
    %v1542 = vadd.s32 %v1534, %v1540
    %vm1543 = vc.u32 %v1541, %v1537
    %v1544 = vsel %vm1543, 1, 0
    %v1545 = vadd.s32 %v1541, %v1537
    %v1546 = vadd.s32 %v1542, %v1544
    %v1547 = vadd.s32 %v1546, %v1536
    %v1548 = vadd.s32 %v1547, %v1538
    %v1549 = vand.u32 %v1526, 65535
    %v1550 = vshrl.u32 %v1526, 16
    %v1551 = vand.u32 %v1521, 65535
    %v1552 = vshrl.u32 %v1521, 16
    %v1553 = vmul.u32 %v1549, %v1551
    %v1554 = vmul.u32 %v1549, %v1552
    %v1555 = vmul.u32 %v1550, %v1551
    %v1556 = vmul.u32 %v1550, %v1552
    %v1557 = vshll.u32 %v1554, 16
    %v1558 = vshrl.u32 %v1554, 16
    %v1559 = vshll.u32 %v1555, 16
    %v1560 = vshrl.u32 %v1555, 16
    %vm1561 = vc.u32 %v1553, %v1557
    %v1562 = vsel %vm1561, 1, 0
    %v1563 = vadd.s32 %v1553, %v1557
    %v1564 = vadd.s32 %v1556, %v1562
    %vm1565 = vc.u32 %v1563, %v1559
    %v1566 = vsel %vm1565, 1, 0
    %v1567 = vadd.s32 %v1563, %v1559
    %v1568 = vadd.s32 %v1564, %v1566
    %v1569 = vadd.s32 %v1568, %v1558
    %v1570 = vadd.s32 %v1569, %v1560
    %v1571 = vmul.u32 %v1526, %v1517
    %v1572 = vadd.s32 %v1548, %v1567
    %vm1573 = vc.u32 %v1548, %v1567
    %v1574 = vadd.s32 %v1570, 1
    %v1575 = vsel %vm1573, %v1574, %v1570
    %v1576 = vadd.s32 %v1571, %v1575
    %v1577 = vadd.s32 %v1576, 536870912
    %v1578 = vshrl.u32 %v1577, 30
    %v1579 = vshll.u32 %v1578, 30
    %v1580 = vsub.s32 %v1576, %v1579
    %vm1581 = vcmp.lt.s32.totalorder %v1580, 0
    %v1582 = vsub.s32 0, %v1580
    %v1583 = vsel %vm1581, %v1582, %v1580
    %v1584 = vclz %v1583
    %v1585 = vsub.s32 %v1584, 2
    %vm1586 = vcmp.gt.s32.totalorder 0, %v1585
    %v1587 = vsel %vm1586, 0, %v1585
    %v1588 = vsub.s32 32, %v1587
    %v1589 = vshll.u32 %v1580, %v1587
    %v1590 = vshrl.u32 %v1572, %v1588
    %v1591 = vor.u32 %v1589, %v1590
    %v1592 = vsub.s32 4294967266, %v1587
    %v1593 = vadd.s32 %v1592, 127
    %v1594 = vshll.u32 %v1593, 23
    %v1595 = vor.u32 4788187, %v1594
    %v1596 = vand.u32 2147483647, %v1595
    %v1598 = vcvt.s32.f32 %v1591
    %v1599 = vmul.f32 %v1598, %v1596
    %v1600 = vxor.u32 %v1599, 2147483648
    %v1601 = vsel %vm1480, %v1600, %v1599
    %v1602 = vsub.s32 4, %v1578
    %v1603 = vsel %vm1480, %v1602, %v1578
    %v1604 = vsel %vm1479, %v1474, %v1601
    %v1605 = vsel %vm1479, 0, %v1603
    %v1606 = vmul.f32 %v1604, %v1604
    %v1607 = vmul.f32 %v1606, -0.001358992
    %v1608 = vadd.f32 %v1607, 0.041655596
    %v1609 = vmul.f32 %v1606, %v1608
    %v1610 = vadd.f32 %v1609, -0.4999988
    %v1611 = vmul.f32 %v1606, %v1610
    %v1612 = vadd.f32 1.0, %v1611
    %v1613 = vmul.f32 %v1604, %v1604
    %v1614 = vmul.f32 %v1613, -0.00019511016
    %v1615 = vadd.f32 %v1614, 0.008332121
    %v1616 = vmul.f32 %v1613, %v1615
    %v1617 = vadd.f32 %v1616, -0.16666654
    %v1618 = vmul.f32 %v1613, %v1617
    %v1619 = vadd.f32 %v1618, 1.0
    %v1620 = vmul.f32 %v1619, %v1604
    %vm1621 = vweird.f32 %v1474
    %v1622 = vadd.s32 %v1605, 3
    %v1623 = vand.u32 %v1622, 3
    %vm1624 = vcmp.lt.s32.totalorder %v1623, 2
    %vm1625 = vcmp.eq.s32.totalorder %v1623, 0
    %v1626 = vxor.u32 %v1620, 2147483648
    %v1627 = vsel %vm1625, %v1612, %v1626
    %vm1628 = vcmp.eq.s32.totalorder %v1623, 2
    %v1629 = vxor.u32 %v1612, 2147483648
    %v1630 = vsel %vm1628, %v1629, %v1620
    %v1631 = vsel %vm1624, %v1627, %v1630
    %v1632 = vsel %vm1621, nan, %v1631
    %v1633 = vand.u32 2147483647, %v1475
    %vm1634 = vcmp.le.f32.partialorder %v1633, 0.7853982
    %vm1635 = vcmp.lt.s32.totalorder %v1475, 0
    %v1636 = vand.u32 %v1475, 2139095040
    %v1637 = vshrl.u32 %v1636, 23
    %v1638 = vsub.s32 %v1637, 127
    %v1639 = vand.u32 2147483647, %v1475
    %v1640 = vand.u32 %v1639, 8388607
    %v1641 = vor.u32 %v1640, 8388608
    %v1642 = vsub.s32 0, %v1641
    %v1643 = vadd.s32 %v1638, 1
    %vm1644 = vcmp.gt.s32.totalorder %v1643, 0
    %v1645 = vsel %vm1644, %v1643, 0
    %v1646 = vshrl.u32 %v1645, 5
    %v1647 = vand.u32 %v1645, 31
    %v1648 = vsub.s32 32, %v1647
    %v1649 = vshrl.u32 683565275, %v1648
    %v1650 = vshll.u32 683565275, %v1647
    %v1651 = vshrl.u32 2475754826, %v1648
    %v1652 = vor.u32 %v1650, %v1651
    %v1653 = vshll.u32 2475754826, %v1647
    %v1654 = vshrl.u32 2131351028, %v1648
    %v1655 = vor.u32 %v1653, %v1654
    %v1656 = vshll.u32 2131351028, %v1647
    %v1657 = vshrl.u32 2102212464, %v1648
    %v1658 = vor.u32 %v1656, %v1657
    %v1659 = vshll.u32 2102212464, %v1647
    %v1660 = vshrl.u32 920167782, %v1648
    %v1661 = vor.u32 %v1659, %v1660
    %v1662 = vshll.u32 920167782, %v1647
    %v1663 = vshrl.u32 1326507024, %v1648
    %v1664 = vor.u32 %v1662, %v1663
    %vm1665 = vcmp.lt.s32.totalorder %v1646, 1
    %vm1666 = vcmp.lt.s32.totalorder %v1646, 2
    %vm1667 = vcmp.lt.s32.totalorder %v1646, 3
    %vm1668 = vcmp.lt.s32.totalorder %v1646, 4
    %v1669 = vsel %vm1665, %v1649, %v1652
    %v1670 = vsel %vm1668, %v1658, 2102212464
    %v1671 = vsel %vm1667, %v1655, %v1670
    %v1672 = vsel %vm1666, %v1669, %v1671
    %v1673 = vsel %vm1665, %v1652, %v1655
    %v1674 = vsel %vm1668, %v1661, 920167782
    %v1675 = vsel %vm1667, %v1658, %v1674
    %v1676 = vsel %vm1666, %v1673, %v1675
    %v1677 = vsel %vm1665, %v1655, %v1658
    %v1678 = vsel %vm1668, %v1664, 1326507024
    %v1679 = vsel %vm1667, %v1661, %v1678
    %v1680 = vsel %vm1666, %v1677, %v1679
    %v1681 = vshll.u32 %v1641, 8
    %v1682 = vand.u32 %v1681, 65535
    %v1683 = vshrl.u32 %v1681, 16
    %v1684 = vand.u32 %v1680, 65535
    %v1685 = vshrl.u32 %v1680, 16
    %v1686 = vmul.u32 %v1682, %v1684
    %v1687 = vmul.u32 %v1682, %v1685
    %v1688 = vmul.u32 %v1683, %v1684
    %v1689 = vmul.u32 %v1683, %v1685
    %v1690 = vshll.u32 %v1687, 16
    %v1691 = vshrl.u32 %v1687, 16
    %v1692 = vshll.u32 %v1688, 16
    %v1693 = vshrl.u32 %v1688, 16
    %vm1694 = vc.u32 %v1686, %v1690
    %v1695 = vsel %vm1694, 1, 0
    %v1696 = vadd.s32 %v1686, %v1690
    %v1697 = vadd.s32 %v1689, %v1695
    %vm1698 = vc.u32 %v1696, %v1692
    %v1699 = vsel %vm1698, 1, 0
    %v1700 = vadd.s32 %v1696, %v1692
    %v1701 = vadd.s32 %v1697, %v1699
    %v1702 = vadd.s32 %v1701, %v1691
    %v1703 = vadd.s32 %v1702, %v1693
    %v1704 = vand.u32 %v1681, 65535
    %v1705 = vshrl.u32 %v1681, 16
    %v1706 = vand.u32 %v1676, 65535
    %v1707 = vshrl.u32 %v1676, 16
    %v1708 = vmul.u32 %v1704, %v1706
    %v1709 = vmul.u32 %v1704, %v1707
    %v1710 = vmul.u32 %v1705, %v1706
    %v1711 = vmul.u32 %v1705, %v1707
    %v1712 = vshll.u32 %v1709, 16
    %v1713 = vshrl.u32 %v1709, 16
    %v1714 = vshll.u32 %v1710, 16
    %v1715 = vshrl.u32 %v1710, 16
    %vm1716 = vc.u32 %v1708, %v1712
    %v1717 = vsel %vm1716, 1, 0
    %v1718 = vadd.s32 %v1708, %v1712
    %v1719 = vadd.s32 %v1711, %v1717
    %vm1720 = vc.u32 %v1718, %v1714
    %v1721 = vsel %vm1720, 1, 0
    %v1722 = vadd.s32 %v1718, %v1714
    %v1723 = vadd.s32 %v1719, %v1721
    %v1724 = vadd.s32 %v1723, %v1713
    %v1725 = vadd.s32 %v1724, %v1715
    %v1726 = vmul.u32 %v1681, %v1672
    %v1727 = vadd.s32 %v1703, %v1722
    %vm1728 = vc.u32 %v1703, %v1722
    %v1729 = vadd.s32 %v1725, 1
    %v1730 = vsel %vm1728, %v1729, %v1725
    %v1731 = vadd.s32 %v1726, %v1730
    %v1732 = vadd.s32 %v1731, 536870912
    %v1733 = vshrl.u32 %v1732, 30
    %v1734 = vshll.u32 %v1733, 30
    %v1735 = vsub.s32 %v1731, %v1734
    %vm1736 = vcmp.lt.s32.totalorder %v1735, 0
    %v1737 = vsub.s32 0, %v1735
    %v1738 = vsel %vm1736, %v1737, %v1735
    %v1739 = vclz %v1738
    %v1740 = vsub.s32 %v1739, 2
    %vm1741 = vcmp.gt.s32.totalorder 0, %v1740
    %v1742 = vsel %vm1741, 0, %v1740
    %v1743 = vsub.s32 32, %v1742
    %v1744 = vshll.u32 %v1735, %v1742
    %v1745 = vshrl.u32 %v1727, %v1743
    %v1746 = vor.u32 %v1744, %v1745
    %v1747 = vsub.s32 4294967266, %v1742
    %v1748 = vadd.s32 %v1747, 127
    %v1749 = vshll.u32 %v1748, 23
    %v1750 = vor.u32 4788187, %v1749
    %v1751 = vand.u32 2147483647, %v1750
    %v1753 = vcvt.s32.f32 %v1746
    %v1754 = vmul.f32 %v1753, %v1751
    %v1755 = vxor.u32 %v1754, 2147483648
    %v1756 = vsel %vm1635, %v1755, %v1754
    %v1757 = vsub.s32 4, %v1733
    %v1758 = vsel %vm1635, %v1757, %v1733
    %v1759 = vsel %vm1634, %v1475, %v1756
    %v1760 = vsel %vm1634, 0, %v1758
    %v1761 = vmul.f32 %v1759, %v1759
    %v1762 = vmul.f32 %v1761, -0.001358992
    %v1763 = vadd.f32 %v1762, 0.041655596
    %v1764 = vmul.f32 %v1761, %v1763
    %v1765 = vadd.f32 %v1764, -0.4999988
    %v1766 = vmul.f32 %v1761, %v1765
    %v1767 = vadd.f32 1.0, %v1766
    %v1768 = vmul.f32 %v1759, %v1759
    %v1769 = vmul.f32 %v1768, -0.00019511016
    %v1770 = vadd.f32 %v1769, 0.008332121
    %v1771 = vmul.f32 %v1768, %v1770
    %v1772 = vadd.f32 %v1771, -0.16666654
    %v1773 = vmul.f32 %v1768, %v1772
    %v1774 = vadd.f32 %v1773, 1.0
    %v1775 = vmul.f32 %v1774, %v1759
    %vm1776 = vweird.f32 %v1475
    %v1777 = vadd.s32 %v1760, 3
    %v1778 = vand.u32 %v1777, 3
    %vm1779 = vcmp.lt.s32.totalorder %v1778, 2
    %vm1780 = vcmp.eq.s32.totalorder %v1778, 0
    %v1781 = vxor.u32 %v1775, 2147483648
    %v1782 = vsel %vm1780, %v1767, %v1781
    %vm1783 = vcmp.eq.s32.totalorder %v1778, 2
    %v1784 = vxor.u32 %v1767, 2147483648
    %v1785 = vsel %vm1783, %v1784, %v1775
    %v1786 = vsel %vm1779, %v1782, %v1785
    %v1787 = vsel %vm1776, nan, %v1786
    %v1788 = vand.u32 2147483647, %v1476
    %vm1789 = vcmp.le.f32.partialorder %v1788, 0.7853982
    %vm1790 = vcmp.lt.s32.totalorder %v1476, 0
    %v1791 = vand.u32 %v1476, 2139095040
    %v1792 = vshrl.u32 %v1791, 23
    %v1793 = vsub.s32 %v1792, 127
    %v1794 = vand.u32 2147483647, %v1476
    %v1795 = vand.u32 %v1794, 8388607
    %v1796 = vor.u32 %v1795, 8388608
    %v1797 = vsub.s32 0, %v1796
    %v1798 = vadd.s32 %v1793, 1
    %vm1799 = vcmp.gt.s32.totalorder %v1798, 0
    %v1800 = vsel %vm1799, %v1798, 0
    %v1801 = vshrl.u32 %v1800, 5
    %v1802 = vand.u32 %v1800, 31
    %v1803 = vsub.s32 32, %v1802
    %v1804 = vshrl.u32 683565275, %v1803
    %v1805 = vshll.u32 683565275, %v1802
    %v1806 = vshrl.u32 2475754826, %v1803
    %v1807 = vor.u32 %v1805, %v1806
    %v1808 = vshll.u32 2475754826, %v1802
    %v1809 = vshrl.u32 2131351028, %v1803
    %v1810 = vor.u32 %v1808, %v1809
    %v1811 = vshll.u32 2131351028, %v1802
    %v1812 = vshrl.u32 2102212464, %v1803
    %v1813 = vor.u32 %v1811, %v1812
    %v1814 = vshll.u32 2102212464, %v1802
    %v1815 = vshrl.u32 920167782, %v1803
    %v1816 = vor.u32 %v1814, %v1815
    %v1817 = vshll.u32 920167782, %v1802
    %v1818 = vshrl.u32 1326507024, %v1803
    %v1819 = vor.u32 %v1817, %v1818
    %vm1820 = vcmp.lt.s32.totalorder %v1801, 1
    %vm1821 = vcmp.lt.s32.totalorder %v1801, 2
    %vm1822 = vcmp.lt.s32.totalorder %v1801, 3
    %vm1823 = vcmp.lt.s32.totalorder %v1801, 4
    %v1824 = vsel %vm1820, %v1804, %v1807
    %v1825 = vsel %vm1823, %v1813, 2102212464
    %v1826 = vsel %vm1822, %v1810, %v1825
    %v1827 = vsel %vm1821, %v1824, %v1826
    %v1828 = vsel %vm1820, %v1807, %v1810
    %v1829 = vsel %vm1823, %v1816, 920167782
    %v1830 = vsel %vm1822, %v1813, %v1829
    %v1831 = vsel %vm1821, %v1828, %v1830
    %v1832 = vsel %vm1820, %v1810, %v1813
    %v1833 = vsel %vm1823, %v1819, 1326507024
    %v1834 = vsel %vm1822, %v1816, %v1833
    %v1835 = vsel %vm1821, %v1832, %v1834
    %v1836 = vshll.u32 %v1796, 8
    %v1837 = vand.u32 %v1836, 65535
    %v1838 = vshrl.u32 %v1836, 16
    %v1839 = vand.u32 %v1835, 65535
    %v1840 = vshrl.u32 %v1835, 16
    %v1841 = vmul.u32 %v1837, %v1839
    %v1842 = vmul.u32 %v1837, %v1840
    %v1843 = vmul.u32 %v1838, %v1839
    %v1844 = vmul.u32 %v1838, %v1840
    %v1845 = vshll.u32 %v1842, 16
    %v1846 = vshrl.u32 %v1842, 16
    %v1847 = vshll.u32 %v1843, 16
    %v1848 = vshrl.u32 %v1843, 16
    %vm1849 = vc.u32 %v1841, %v1845
    %v1850 = vsel %vm1849, 1, 0
    %v1851 = vadd.s32 %v1841, %v1845
    %v1852 = vadd.s32 %v1844, %v1850
    %vm1853 = vc.u32 %v1851, %v1847
    %v1854 = vsel %vm1853, 1, 0
    %v1855 = vadd.s32 %v1851, %v1847
    %v1856 = vadd.s32 %v1852, %v1854
    %v1857 = vadd.s32 %v1856, %v1846
    %v1858 = vadd.s32 %v1857, %v1848
    %v1859 = vand.u32 %v1836, 65535
    %v1860 = vshrl.u32 %v1836, 16
    %v1861 = vand.u32 %v1831, 65535
    %v1862 = vshrl.u32 %v1831, 16
    %v1863 = vmul.u32 %v1859, %v1861
    %v1864 = vmul.u32 %v1859, %v1862
    %v1865 = vmul.u32 %v1860, %v1861
    %v1866 = vmul.u32 %v1860, %v1862
    %v1867 = vshll.u32 %v1864, 16
    %v1868 = vshrl.u32 %v1864, 16
    %v1869 = vshll.u32 %v1865, 16
    %v1870 = vshrl.u32 %v1865, 16
    %vm1871 = vc.u32 %v1863, %v1867
    %v1872 = vsel %vm1871, 1, 0
    %v1873 = vadd.s32 %v1863, %v1867
    %v1874 = vadd.s32 %v1866, %v1872
    %vm1875 = vc.u32 %v1873, %v1869
    %v1876 = vsel %vm1875, 1, 0
    %v1877 = vadd.s32 %v1873, %v1869
    %v1878 = vadd.s32 %v1874, %v1876
    %v1879 = vadd.s32 %v1878, %v1868
    %v1880 = vadd.s32 %v1879, %v1870
    %v1881 = vmul.u32 %v1836, %v1827
    %v1882 = vadd.s32 %v1858, %v1877
    %vm1883 = vc.u32 %v1858, %v1877
    %v1884 = vadd.s32 %v1880, 1
    %v1885 = vsel %vm1883, %v1884, %v1880
    %v1886 = vadd.s32 %v1881, %v1885
    %v1887 = vadd.s32 %v1886, 536870912
    %v1888 = vshrl.u32 %v1887, 30
    %v1889 = vshll.u32 %v1888, 30
    %v1890 = vsub.s32 %v1886, %v1889
    %vm1891 = vcmp.lt.s32.totalorder %v1890, 0
    %v1892 = vsub.s32 0, %v1890
    %v1893 = vsel %vm1891, %v1892, %v1890
    %v1894 = vclz %v1893
    %v1895 = vsub.s32 %v1894, 2
    %vm1896 = vcmp.gt.s32.totalorder 0, %v1895
    %v1897 = vsel %vm1896, 0, %v1895
    %v1898 = vsub.s32 32, %v1897
    %v1899 = vshll.u32 %v1890, %v1897
    %v1900 = vshrl.u32 %v1882, %v1898
    %v1901 = vor.u32 %v1899, %v1900
    %v1902 = vsub.s32 4294967266, %v1897
    %v1903 = vadd.s32 %v1902, 127
    %v1904 = vshll.u32 %v1903, 23
    %v1905 = vor.u32 4788187, %v1904
    %v1906 = vand.u32 2147483647, %v1905
    %v1908 = vcvt.s32.f32 %v1901
    %v1909 = vmul.f32 %v1908, %v1906
    %v1910 = vxor.u32 %v1909, 2147483648
    %v1911 = vsel %vm1790, %v1910, %v1909
    %v1912 = vsub.s32 4, %v1888
    %v1913 = vsel %vm1790, %v1912, %v1888
    %v1914 = vsel %vm1789, %v1476, %v1911
    %v1915 = vsel %vm1789, 0, %v1913
    %v1916 = vmul.f32 %v1914, %v1914
    %v1917 = vmul.f32 %v1916, -0.001358992
    %v1918 = vadd.f32 %v1917, 0.041655596
    %v1919 = vmul.f32 %v1916, %v1918
    %v1920 = vadd.f32 %v1919, -0.4999988
    %v1921 = vmul.f32 %v1916, %v1920
    %v1922 = vadd.f32 1.0, %v1921
    %v1923 = vmul.f32 %v1914, %v1914
    %v1924 = vmul.f32 %v1923, -0.00019511016
    %v1925 = vadd.f32 %v1924, 0.008332121
    %v1926 = vmul.f32 %v1923, %v1925
    %v1927 = vadd.f32 %v1926, -0.16666654
    %v1928 = vmul.f32 %v1923, %v1927
    %v1929 = vadd.f32 %v1928, 1.0
    %v1930 = vmul.f32 %v1929, %v1914
    %vm1931 = vweird.f32 %v1476
    %v1932 = vadd.s32 %v1915, 3
    %v1933 = vand.u32 %v1932, 3
    %vm1934 = vcmp.lt.s32.totalorder %v1933, 2
    %vm1935 = vcmp.eq.s32.totalorder %v1933, 0
    %v1936 = vxor.u32 %v1930, 2147483648
    %v1937 = vsel %vm1935, %v1922, %v1936
    %vm1938 = vcmp.eq.s32.totalorder %v1933, 2
    %v1939 = vxor.u32 %v1922, 2147483648
    %v1940 = vsel %vm1938, %v1939, %v1930
    %v1941 = vsel %vm1934, %v1937, %v1940
    %v1942 = vsel %vm1931, nan, %v1941
    %v1943 = vand.u32 2147483647, %v1477
    %vm1944 = vcmp.le.f32.partialorder %v1943, 0.7853982
    %vm1945 = vcmp.lt.s32.totalorder %v1477, 0
    %v1946 = vand.u32 %v1477, 2139095040
    %v1947 = vshrl.u32 %v1946, 23
    %v1948 = vsub.s32 %v1947, 127
    %v1949 = vand.u32 2147483647, %v1477
    %v1950 = vand.u32 %v1949, 8388607
    %v1951 = vor.u32 %v1950, 8388608
    %v1952 = vsub.s32 0, %v1951
    %v1953 = vadd.s32 %v1948, 1
    %vm1954 = vcmp.gt.s32.totalorder %v1953, 0
    %v1955 = vsel %vm1954, %v1953, 0
    %v1956 = vshrl.u32 %v1955, 5
    %v1957 = vand.u32 %v1955, 31
    %v1958 = vsub.s32 32, %v1957
    %v1959 = vshrl.u32 683565275, %v1958
    %v1960 = vshll.u32 683565275, %v1957
    %v1961 = vshrl.u32 2475754826, %v1958
    %v1962 = vor.u32 %v1960, %v1961
    %v1963 = vshll.u32 2475754826, %v1957
    %v1964 = vshrl.u32 2131351028, %v1958
    %v1965 = vor.u32 %v1963, %v1964
    %v1966 = vshll.u32 2131351028, %v1957
    %v1967 = vshrl.u32 2102212464, %v1958
    %v1968 = vor.u32 %v1966, %v1967
    %v1969 = vshll.u32 2102212464, %v1957
    %v1970 = vshrl.u32 920167782, %v1958
    %v1971 = vor.u32 %v1969, %v1970
    %v1972 = vshll.u32 920167782, %v1957
    %v1973 = vshrl.u32 1326507024, %v1958
    %v1974 = vor.u32 %v1972, %v1973
    %vm1975 = vcmp.lt.s32.totalorder %v1956, 1
    %vm1976 = vcmp.lt.s32.totalorder %v1956, 2
    %vm1977 = vcmp.lt.s32.totalorder %v1956, 3
    %vm1978 = vcmp.lt.s32.totalorder %v1956, 4
    %v1979 = vsel %vm1975, %v1959, %v1962
    %v1980 = vsel %vm1978, %v1968, 2102212464
    %v1981 = vsel %vm1977, %v1965, %v1980
    %v1982 = vsel %vm1976, %v1979, %v1981
    %v1983 = vsel %vm1975, %v1962, %v1965
    %v1984 = vsel %vm1978, %v1971, 920167782
    %v1985 = vsel %vm1977, %v1968, %v1984
    %v1986 = vsel %vm1976, %v1983, %v1985
    %v1987 = vsel %vm1975, %v1965, %v1968
    %v1988 = vsel %vm1978, %v1974, 1326507024
    %v1989 = vsel %vm1977, %v1971, %v1988
    %v1990 = vsel %vm1976, %v1987, %v1989
    %v1991 = vshll.u32 %v1951, 8
    %v1992 = vand.u32 %v1991, 65535
    %v1993 = vshrl.u32 %v1991, 16
    %v1994 = vand.u32 %v1990, 65535
    %v1995 = vshrl.u32 %v1990, 16
    %v1996 = vmul.u32 %v1992, %v1994
    %v1997 = vmul.u32 %v1992, %v1995
    %v1998 = vmul.u32 %v1993, %v1994
    %v1999 = vmul.u32 %v1993, %v1995
    %v2000 = vshll.u32 %v1997, 16
    %v2001 = vshrl.u32 %v1997, 16
    %v2002 = vshll.u32 %v1998, 16
    %v2003 = vshrl.u32 %v1998, 16
    %vm2004 = vc.u32 %v1996, %v2000
    %v2005 = vsel %vm2004, 1, 0
    %v2006 = vadd.s32 %v1996, %v2000
    %v2007 = vadd.s32 %v1999, %v2005
    %vm2008 = vc.u32 %v2006, %v2002
    %v2009 = vsel %vm2008, 1, 0
    %v2010 = vadd.s32 %v2006, %v2002
    %v2011 = vadd.s32 %v2007, %v2009
    %v2012 = vadd.s32 %v2011, %v2001
    %v2013 = vadd.s32 %v2012, %v2003
    %v2014 = vand.u32 %v1991, 65535
    %v2015 = vshrl.u32 %v1991, 16
    %v2016 = vand.u32 %v1986, 65535
    %v2017 = vshrl.u32 %v1986, 16
    %v2018 = vmul.u32 %v2014, %v2016
    %v2019 = vmul.u32 %v2014, %v2017
    %v2020 = vmul.u32 %v2015, %v2016
    %v2021 = vmul.u32 %v2015, %v2017
    %v2022 = vshll.u32 %v2019, 16
    %v2023 = vshrl.u32 %v2019, 16
    %v2024 = vshll.u32 %v2020, 16
    %v2025 = vshrl.u32 %v2020, 16
    %vm2026 = vc.u32 %v2018, %v2022
    %v2027 = vsel %vm2026, 1, 0
    %v2028 = vadd.s32 %v2018, %v2022
    %v2029 = vadd.s32 %v2021, %v2027
    %vm2030 = vc.u32 %v2028, %v2024
    %v2031 = vsel %vm2030, 1, 0
    %v2032 = vadd.s32 %v2028, %v2024
    %v2033 = vadd.s32 %v2029, %v2031
    %v2034 = vadd.s32 %v2033, %v2023
    %v2035 = vadd.s32 %v2034, %v2025
    %v2036 = vmul.u32 %v1991, %v1982
    %v2037 = vadd.s32 %v2013, %v2032
    %vm2038 = vc.u32 %v2013, %v2032
    %v2039 = vadd.s32 %v2035, 1
    %v2040 = vsel %vm2038, %v2039, %v2035
    %v2041 = vadd.s32 %v2036, %v2040
    %v2042 = vadd.s32 %v2041, 536870912
    %v2043 = vshrl.u32 %v2042, 30
    %v2044 = vshll.u32 %v2043, 30
    %v2045 = vsub.s32 %v2041, %v2044
    %vm2046 = vcmp.lt.s32.totalorder %v2045, 0
    %v2047 = vsub.s32 0, %v2045
    %v2048 = vsel %vm2046, %v2047, %v2045
    %v2049 = vclz %v2048
    %v2050 = vsub.s32 %v2049, 2
    %vm2051 = vcmp.gt.s32.totalorder 0, %v2050
    %v2052 = vsel %vm2051, 0, %v2050
    %v2053 = vsub.s32 32, %v2052
    %v2054 = vshll.u32 %v2045, %v2052
    %v2055 = vshrl.u32 %v2037, %v2053
    %v2056 = vor.u32 %v2054, %v2055
    %v2057 = vsub.s32 4294967266, %v2052
    %v2058 = vadd.s32 %v2057, 127
    %v2059 = vshll.u32 %v2058, 23
    %v2060 = vor.u32 4788187, %v2059
    %v2061 = vand.u32 2147483647, %v2060
    %v2063 = vcvt.s32.f32 %v2056
    %v2064 = vmul.f32 %v2063, %v2061
    %v2065 = vxor.u32 %v2064, 2147483648
    %v2066 = vsel %vm1945, %v2065, %v2064
    %v2067 = vsub.s32 4, %v2043
    %v2068 = vsel %vm1945, %v2067, %v2043
    %v2069 = vsel %vm1944, %v1477, %v2066
    %v2070 = vsel %vm1944, 0, %v2068
    %v2071 = vmul.f32 %v2069, %v2069
    %v2072 = vmul.f32 %v2071, -0.001358992
    %v2073 = vadd.f32 %v2072, 0.041655596
    %v2074 = vmul.f32 %v2071, %v2073
    %v2075 = vadd.f32 %v2074, -0.4999988
    %v2076 = vmul.f32 %v2071, %v2075
    %v2077 = vadd.f32 1.0, %v2076
    %v2078 = vmul.f32 %v2069, %v2069
    %v2079 = vmul.f32 %v2078, -0.00019511016
    %v2080 = vadd.f32 %v2079, 0.008332121
    %v2081 = vmul.f32 %v2078, %v2080
    %v2082 = vadd.f32 %v2081, -0.16666654
    %v2083 = vmul.f32 %v2078, %v2082
    %v2084 = vadd.f32 %v2083, 1.0
    %v2085 = vmul.f32 %v2084, %v2069
    %vm2086 = vweird.f32 %v1477
    %v2087 = vadd.s32 %v2070, 3
    %v2088 = vand.u32 %v2087, 3
    %vm2089 = vcmp.lt.s32.totalorder %v2088, 2
    %vm2090 = vcmp.eq.s32.totalorder %v2088, 0
    %v2091 = vxor.u32 %v2085, 2147483648
    %v2092 = vsel %vm2090, %v2077, %v2091
    %vm2093 = vcmp.eq.s32.totalorder %v2088, 2
    %v2094 = vxor.u32 %v2077, 2147483648
    %v2095 = vsel %vm2093, %v2094, %v2085
    %v2096 = vsel %vm2089, %v2092, %v2095
    %v2097 = vsel %vm2086, nan, %v2096
    %v2098 = vld [vmem:[%s14] sm:$0xf]
    %v2099 = vld [vmem:[%s14 + $0x4] sm:$0xf]
    %v2100 = vld [vmem:[%s14 + $0x8] sm:$0xf]
    %v2101 = vld [vmem:[%s14 + $0xc] sm:$0xf]
    %v2102 = vpack.c.bf16 %v1437, %v1435
    %v2103 = vpack.c.bf16 %v1438, %v1436
    %v2104 = vpack.c.bf16 %v1441, %v1439
    %v2105 = vpack.c.bf16 %v1442, %v1440
    %v2106 = vld [vmem:[%s16] sm:$0xf]
    %v2107 = vld [vmem:[%s16 + $0x4] sm:$0xf]
    %v2108 = vld [vmem:[%s16 + $0x8] sm:$0xf]
    %v2109 = vld [vmem:[%s16 + $0xc] sm:$0xf]
    %v2110 = vpack.c.bf16 %v1942, %v1632
    %v2111 = vpack.c.bf16 %v2097, %v1787
    %v2116 = vunpack.c.l.b16 %v2106
    %v2117 = vunpack.c.l.b16 %v2107
    %v2118 = vunpack.c.l.b16 %v2108
    %v2119 = vunpack.c.l.b16 %v2109
    %v2120 = vpack.c.b16 %v2117, %v2116
    %v2121 = vpack.c.b16 %v2119, %v2118
    %vm2122 = vcmask 97280
    %v2124 = vsel %vm2122, %v2120, 0
    %v2127 = vsel %vm2122, %v2121, 0
    %vm2129 = vcmask 1045504
    %v2131 = vsel %vm2129, %v2110, 0
    %v2134 = vsel %vm2129, %v2111, 0
    %2136 = vmatpush.bf16.msra.mxu0 0
    %2137 = vmatpush.bf16.msra.mxu0 0
    %2138 = vmatpush.bf16.msra.mxu0 0
    %2139 = vmatpush.bf16.msra.mxu0 0
    %2140 = vmatpush.bf16.msra.mxu0 0
    %2141 = vmatpush.bf16.msra.mxu0 0
    %2142 = vmatpush.bf16.msra.mxu0 0
    %2143 = vmatpush.bf16.msra.mxu0 %v2131
    %2144 = vmatmul.bf16.gmra.mxu0 %v2124
    %v2145 = vpop.f32.mrf.mxu0
    %v2146 = vadd.f32 0.0, %v2145
    %v2147 = vpop.f32.mrf.mxu0
    %v2148 = vadd.f32 0.0, %v2147
    %2149 = vmatmul.bf16.gmra.mxu0 %v2127
    %v2150 = vpop.f32.mrf.mxu0
    %v2151 = vadd.f32 0.0, %v2150
    %v2152 = vpop.f32.mrf.mxu0
    %v2153 = vadd.f32 0.0, %v2152
    %2154 = vdwg.mxu0
    %2155 = vmatpush.bf16.msra.mxu0 0
    %2156 = vmatpush.bf16.msra.mxu0 0
    %2157 = vmatpush.bf16.msra.mxu0 0
    %2158 = vmatpush.bf16.msra.mxu0 0
    %2159 = vmatpush.bf16.msra.mxu0 0
    %2160 = vmatpush.bf16.msra.mxu0 0
    %2161 = vmatpush.bf16.msra.mxu0 0
    %2162 = vmatpush.bf16.msra.mxu0 %v2134
    %2163 = vmatmul.bf16.gmra.mxu0 %v2124
    %v2164 = vpop.f32.mrf.mxu0
    %v2165 = vadd.f32 0.0, %v2164
    %v2166 = vpop.f32.mrf.mxu0
    %v2167 = vadd.f32 0.0, %v2166
    %2168 = vmatmul.bf16.gmra.mxu0 %v2127
    %v2169 = vpop.f32.mrf.mxu0
    %v2170 = vadd.f32 0.0, %v2169
    %v2171 = vpop.f32.mrf.mxu0
    %v2172 = vadd.f32 0.0, %v2171
    %2173 = vdwg.mxu0
    %v2178 = vunpack.c.l.b16 %v2098
    %v2179 = vunpack.c.l.b16 %v2099
    %v2180 = vunpack.c.l.b16 %v2100
    %v2181 = vunpack.c.l.b16 %v2101
    %v2182 = vpack.c.b16 %v2179, %v2178
    %v2183 = vpack.c.b16 %v2181, %v2180
    %v2185 = vsel %vm268, %v2182, 0
    %v2188 = vsel %vm268, %v2183, 0
    %2190 = vmatpush.bf16.msra.mxu0 0
    %2191 = vmatpush.bf16.msra.mxu0 0
    %2192 = vmatpush.bf16.msra.mxu0 0
    %2193 = vmatpush.bf16.msra.mxu0 0
    %2194 = vmatpush.bf16.msra.mxu0 0
    %2195 = vmatpush.bf16.msra.mxu0 0
    %2196 = vmatpush.bf16.msra.mxu0 %v2104
    %2197 = vmatpush.bf16.msra.mxu0 %v2102
    %2198 = vmatmul.bf16.gmra.mxu0 %v2185
    %v2199 = vpop.f32.mrf.mxu0
    %v2200 = vadd.f32 %v2146, %v2199
    %v2201 = vpop.f32.mrf.mxu0
    %v2202 = vadd.f32 %v2148, %v2201
    %2203 = vmatmul.bf16.gmra.mxu0 %v2188
    %v2204 = vpop.f32.mrf.mxu0
    %v2205 = vadd.f32 %v2151, %v2204
    %v2206 = vpop.f32.mrf.mxu0
    %v2207 = vadd.f32 %v2153, %v2206
    %2208 = vdwg.mxu0
    %2209 = vmatpush.bf16.msra.mxu0 0
    %2210 = vmatpush.bf16.msra.mxu0 0
    %2211 = vmatpush.bf16.msra.mxu0 0
    %2212 = vmatpush.bf16.msra.mxu0 0
    %2213 = vmatpush.bf16.msra.mxu0 0
    %2214 = vmatpush.bf16.msra.mxu0 0
    %2215 = vmatpush.bf16.msra.mxu0 %v2105
    %2216 = vmatpush.bf16.msra.mxu0 %v2103
    %2217 = vmatmul.bf16.gmra.mxu0 %v2185
    %v2218 = vpop.f32.mrf.mxu0
    %v2219 = vadd.f32 %v2165, %v2218
    %v2220 = vpop.f32.mrf.mxu0
    %v2221 = vadd.f32 %v2167, %v2220
    %2222 = vmatmul.bf16.gmra.mxu0 %v2188
    %v2223 = vpop.f32.mrf.mxu0
    %v2224 = vadd.f32 %v2170, %v2223
    %v2225 = vpop.f32.mrf.mxu0
    %v2226 = vadd.f32 %v2172, %v2225
    %2227 = vdwg.mxu0
    %v2228 = vld [vmem:[%s15] sm:$0xff]
    %v2229 = vld [vmem:[%s15 + $0x8] sm:$0xff]
    %v2230 = vld [vmem:[%s15 + $0x10] sm:$0xff]
    %v2231 = vld [vmem:[%s15 + $0x18] sm:$0xff]
    %2233 = vset.pattern.permute.xlu0 0
    %2234 = vperm.xlu0 %2233, %v2228
    %v2235 = vpop.permute.xlu0 %2234
    %2238 = vset.pattern.permute.xlu0 0
    %2239 = vperm.xlu0 %2238, %v2229
    %v2240 = vpop.permute.xlu0 %2239
    %2243 = vset.pattern.permute.xlu0 0
    %2244 = vperm.xlu0 %2243, %v2230
    %v2245 = vpop.permute.xlu0 %2244
    %2248 = vset.pattern.permute.xlu0 0
    %2249 = vperm.xlu0 %2248, %v2231
    %v2250 = vpop.permute.xlu0 %2249
    %v2252 = vmul.f32 %v2235, %v1466
    %v2253 = vmul.f32 %v2235, %v1467
    %v2254 = vmul.f32 %v2240, %v1466
    %v2255 = vmul.f32 %v2240, %v1467
    %v2256 = vmul.f32 %v2245, %v1466
    %v2257 = vmul.f32 %v2245, %v1467
    %v2258 = vmul.f32 %v2250, %v1466
    %v2259 = vmul.f32 %v2250, %v1467
    %v2260 = vadd.f32 %v2200, %v2252
    %v2261 = vadd.f32 %v2219, %v2253
    %v2262 = vadd.f32 %v2202, %v2254
    %v2263 = vadd.f32 %v2221, %v2255
    %v2264 = vadd.f32 %v2205, %v2256
    %v2265 = vadd.f32 %v2224, %v2257
    %v2266 = vadd.f32 %v2207, %v2258
    %v2267 = vadd.f32 %v2226, %v2259
    %v2268 = vld [vmem:[%s17] sm:$0xff]
    %v2269 = vld [vmem:[%s17 + $0x8] sm:$0xff]
    %v2270 = vld [vmem:[%s17 + $0x10] sm:$0xff]
    %v2271 = vld [vmem:[%s17 + $0x18] sm:$0xff]
    %2273 = vset.pattern.permute.xlu0 0
    %2274 = vperm.xlu0 %2273, %v2268
    %v2275 = vpop.permute.xlu0 %2274
    %2278 = vset.pattern.permute.xlu0 0
    %2279 = vperm.xlu0 %2278, %v2269
    %v2280 = vpop.permute.xlu0 %2279
    %2283 = vset.pattern.permute.xlu0 0
    %2284 = vperm.xlu0 %2283, %v2270
    %v2285 = vpop.permute.xlu0 %2284
    %2288 = vset.pattern.permute.xlu0 0
    %2289 = vperm.xlu0 %2288, %v2271
    %v2290 = vpop.permute.xlu0 %2289
    %v2292 = vadd.f32 %v2260, %v2275
    %v2293 = vadd.f32 %v2261, %v2275
    %v2294 = vadd.f32 %v2262, %v2280
    %v2295 = vadd.f32 %v2263, %v2280
    %v2296 = vadd.f32 %v2264, %v2285
    %v2297 = vadd.f32 %v2265, %v2285
    %v2298 = vadd.f32 %v2266, %v2290
    %v2299 = vadd.f32 %v2267, %v2290
    %v2300 = vmax.f32 %v2292, 0.0
    %v2301 = vmax.f32 %v2293, 0.0
    %v2302 = vmax.f32 %v2294, 0.0
    %v2303 = vmax.f32 %v2295, 0.0
    %v2304 = vmax.f32 %v2296, 0.0
    %v2305 = vmax.f32 %v2297, 0.0
    %v2306 = vmax.f32 %v2298, 0.0
    %v2307 = vmax.f32 %v2299, 0.0
    %v2308 = vld [vmem:[%s18] sm:$0xff]
    %v2309 = vld [vmem:[%s18 + $0x8] sm:$0xff]
    %v2310 = vld [vmem:[%s18 + $0x10] sm:$0xff]
    %v2311 = vld [vmem:[%s18 + $0x18] sm:$0xff]
    %2313 = vset.pattern.permute.xlu0 0
    %2314 = vperm.xlu0 %2313, %v2308
    %v2315 = vpop.permute.xlu0 %2314
    %2318 = vset.pattern.permute.xlu0 0
    %2319 = vperm.xlu0 %2318, %v2309
    %v2320 = vpop.permute.xlu0 %2319
    %2323 = vset.pattern.permute.xlu0 0
    %2324 = vperm.xlu0 %2323, %v2310
    %v2325 = vpop.permute.xlu0 %2324
    %2328 = vset.pattern.permute.xlu0 0
    %2329 = vperm.xlu0 %2328, %v2311
    %v2330 = vpop.permute.xlu0 %2329
    %v2332 = vmul.f32 %v2315, %v2300
    %v2333 = vmul.f32 %v2315, %v2301
    %v2334 = vmul.f32 %v2320, %v2302
    %v2335 = vmul.f32 %v2320, %v2303
    %v2336 = vmul.f32 %v2325, %v2304
    %v2337 = vmul.f32 %v2325, %v2305
    %v2338 = vmul.f32 %v2330, %v2306
    %v2339 = vmul.f32 %v2330, %v2307
    %v2340 = vadd.f32 %v2332, %v2334
    %v2341 = vadd.f32 %v2340, %v2336
    %v2342 = vadd.f32 %v2341, %v2338
    %v2343 = vrot.slane %v2342, 4
    %v2344 = vadd.f32 %v2342, %v2343
    %v2345 = vrot.slane %v2344, 2
    %v2346 = vadd.f32 %v2344, %v2345
    %v2347 = vrot.slane %v2346, 1
    %v2348 = vadd.f32 %v2346, %v2347
    %v2349 = vadd.f32 %v2333, %v2335
    %v2350 = vadd.f32 %v2349, %v2337
    %v2351 = vadd.f32 %v2350, %v2339
    %v2352 = vrot.slane %v2351, 4
    %v2353 = vadd.f32 %v2351, %v2352
    %v2354 = vrot.slane %v2353, 2
    %v2355 = vadd.f32 %v2353, %v2354
    %v2356 = vrot.slane %v2355, 1
    %v2357 = vadd.f32 %v2355, %v2356
    %v2358 = vld [vmem:[#allocation2] sm:$0x1]
    %2360 = vset.pattern.permute.xlu0 0
    %2361 = vperm.xlu0 %2360, %v2358
    %v2362 = vpop.permute.xlu0 %2361
    %v2364 = vperm.slane %v2362, 0
    %v2365 = vadd.f32 %v2348, %v2364
    %v2366 = vadd.f32 %v2357, %v2364
    %v2369 = vrot.slane %v2366, 7
    %vm2370 = vcmask 1040384
    %v2371 = vsel %vm2370, %v2365, %v2369
    %v2373 = vlaneseq
    %vm2374 = vcmp.ge.s32.totalorder %v2373, 0
    %vm2375 = vcmp.lt.s32.totalorder %v2373, 256
    %vm2376 = vmand %vm2374, %vm2375
    %2377 = vst.msk [vmem:[#allocation3] sm:$0x3] %vm2376, %v2371
    // Predicated region
    $region82: #{tpu_custom_call.1} parent=1 // pred_check
      _
    $region83: #{tpu_custom_call.1} parent=1 // pred_check_branch
      %2379 = sbr.rel (0) target = $region85
    $region84: #{tpu_custom_call.1} parent=1 // pred_region
      %2381 = vsyncadd [#allocation4], 0
      %s2383 = sshll.u32 [#allocation3], 4
      %s2384 = int_to_ptr.vmem [resolvable:$true] %s2383
      %s2385 = sshll.u32 %s20, 4
      %s2386 = int_to_ptr.hbm [resolvable:$true] %s2385
      %2388 = dma.vmem_to_hbm [thread:$0]  %s2384, 32, %s2386, [#allocation4]
    $region85: #{tpu_custom_call.1} parent=1 // pred_fallthru
      _
    // Predicated region
    $region86: #{tpu_custom_call.1} parent=1 // pred_check
      _
    $region87: #{tpu_custom_call.1} parent=1 // pred_check_branch
      %2390 = sbr.rel (0) target = $region89
    $region88: #{tpu_custom_call.1} parent=1 // pred_region
      %2392 = dma.done [#allocation4], 32
    $region89: #{tpu_custom_call.1} parent=1 // pred_fallthru
      _
    %2393 = vsyncpa [#allocation4], 1

</llo_original>
